<compile_context>
chip_gen: v7x
topology: tpu7x:2x2x1
jax: 0.10.0
libtpu: 0.0.40
codegen_flags: <defaults>
</compile_context>

<pallas_src>
import math
import functools

import jax
import jax.numpy as jnp
from jax import lax
from jax.experimental import pallas as pl
from jax.experimental.pallas import tpu as pltpu

GN_EPS = 1e-5
LN_EPS = 1e-5

_SQRT_HALF = 0.7071067811865476
_SQRT_2_OVER_PI = 0.7978845608028654


def _round_up(n, m):
    return ((n + m - 1) // m) * m


@functools.lru_cache(maxsize=None)
def _vmem_limit_bytes():
    # Scoped-VMEM ceiling derived from the chip: ~half the physical capacity
    # (v5e/v6e 128 MiB -> 64 MiB, v7x 64 MiB -> 32 MiB), never below 32 MiB so
    # row_tile=512 at K=1536 f32 still compiles on v5e's 16 MiB scoped default.
    try:
        cap = pltpu.get_tpu_info().vmem_capacity_bytes
    except Exception:
        cap = 128 * 1024 * 1024
    return int(min(64 * 1024 * 1024, max(32 * 1024 * 1024, cap // 2)))


# --------------------------------------------------------------------------
# Exact (erf-based) GELU matching torch.nn.GELU(); erf via Abramowitz-Stegun
# 7.1.26 (|err| < 1.5e-7) so only exp/mul/add/select are needed in-kernel.
# gelu_approx=True switches to the tanh form (1 EUP op + few VALU ops) for
# v6e-style VALU relief when tolerance allows.
# --------------------------------------------------------------------------
def _erf(x):
    ax = jnp.abs(x)
    t = 1.0 / (1.0 + 0.3275911 * ax)
    poly = t * (0.254829592 + t * (-0.284496736 + t * (1.421413741
               + t * (-1.453152027 + t * 1.061405429))))
    y = 1.0 - poly * jnp.exp(-ax * ax)
    return jnp.where(x >= 0.0, y, -y)


def _gelu(x, approximate=False):
    if approximate:
        return 0.5 * x * (1.0 + jnp.tanh(_SQRT_2_OVER_PI * (x + 0.044715 * x * x * x)))
    return 0.5 * x * (1.0 + _erf(x * _SQRT_HALF))


# --------------------------------------------------------------------------
# Kernel 1: im2col conv as a row-tiled GEMM with fused bias / GELU / LayerNorm.
# Operands arrive in their HBM storage dtype (f32 or bf16); MXU accumulates f32.
# --------------------------------------------------------------------------
def _conv_gemm_kernel(*refs, has_bias, epilogue, gelu_approx):
    p_ref, w_ref = refs[0], refs[1]
    i = 2
    if has_bias:
        b_ref = refs[i]
        i += 1
    if epilogue == "ln_gelu":
        g_ref, be_ref = refs[i], refs[i + 1]
        i += 2
    o_ref = refs[i]

    y = jnp.dot(p_ref[...], w_ref[...], preferred_element_type=jnp.float32)
    if has_bias:
        y = y + b_ref[...].astype(jnp.float32)
    if epilogue == "ln_gelu":
        mean = jnp.mean(y, axis=-1, keepdims=True)
        var = jnp.mean((y - mean) ** 2, axis=-1, keepdims=True)
        y = (y - mean) * lax.rsqrt(var + LN_EPS)
        y = y * g_ref[...].astype(jnp.float32) + be_ref[...].astype(jnp.float32)
        y = _gelu(y, gelu_approx)
    elif epilogue == "gelu":
        y = _gelu(y, gelu_approx)
    o_ref[...] = y.astype(o_ref.dtype)


def _conv_gemm(patches, wmat, bias=None, *, epilogue="none", ln_g=None,
               ln_b=None, out_dtype=jnp.float32, row_tile=512,
               gelu_approx=False):
    """patches: [N, K] (k-major cols), wmat: [K, C_out], bias: [C_out] or None."""
    N, K = patches.shape
    _, C = wmat.shape

    # Row tile: as large as possible (512 rows at real lengths; sweep to 1024
    # on v6e's 128 MiB VMEM) to amortize per-step overhead, but split short
    # inputs into >= 2 grid steps so v7x megacore sharding has work for both
    # cores.  Ragged tail block: Pallas clamps the DMAs (OOB reads unused,
    # OOB writes dropped), so no jnp.pad / out[:N] passes over the big array.
    tn = max(8, min(_round_up(row_tile, 8), _round_up(-(-N // 2), 8)))
    grid = (pl.cdiv(N, tn),)

    in_specs = [pl.BlockSpec((tn, K), lambda i: (i, 0))]      # streamed rows
    args = [patches]
    # Weights / bias / LN affine stay VMEM-resident (constant index_map).
    # TODO(synk): single-buffer these via pipeline_mode=pl.Buffered(1) once
    # verified on the target jax version (saves one redundant VMEM buffer).
    in_specs.append(pl.BlockSpec((K, C), lambda i: (0, 0)))
    args.append(wmat)
    has_bias = bias is not None
    if has_bias:
        in_specs.append(pl.BlockSpec((1, C), lambda i: (0, 0)))
        args.append(bias.reshape(1, C).astype(jnp.float32))
    if epilogue == "ln_gelu":
        in_specs += [pl.BlockSpec((1, C), lambda i: (0, 0)),
                     pl.BlockSpec((1, C), lambda i: (0, 0))]
        args += [ln_g.reshape(1, C).astype(jnp.float32),
                 ln_b.reshape(1, C).astype(jnp.float32)]

    kern = functools.partial(_conv_gemm_kernel, has_bias=has_bias,
                             epilogue=epilogue, gelu_approx=gelu_approx)
    return pl.pallas_call(
        kern,
        out_shape=jax.ShapeDtypeStruct((N, C), out_dtype),
        grid=grid,
        in_specs=in_specs,
        out_specs=pl.BlockSpec((tn, C), lambda i: (i, 0)),
        compiler_params=pltpu.CompilerParams(
            dimension_semantics=("parallel",),
            vmem_limit_bytes=_vmem_limit_bytes()),
    )(*args)


# --------------------------------------------------------------------------
# Kernel 2: Fp32GroupNorm(C, C) + GELU for layer 0 (mode='default'),
# time-tiled in two passes so VMEM stays bounded at real sequence lengths.
#   Pass A: per-(b, c) sum / sum-of-squares accumulated over T tiles
#           (last grid axis "arbitrary", output block resident in VMEM).
#   Pass B: per-(b, c) scale/shift (folded in the wrapper) + GELU.
# --------------------------------------------------------------------------
def _gn_stats_kernel(y_ref, s_ref, ss_ref, *, t_total, t_tile):
    @pl.when(pl.program_id(2) == 0)
    def _():
        s_ref[...] = jnp.zeros_like(s_ref)
        ss_ref[...] = jnp.zeros_like(ss_ref)

    y = y_ref[...].astype(jnp.float32)                      # [1, tt, tc]
    if t_total % t_tile != 0:                               # mask ragged tail
        t0 = pl.program_id(2) * t_tile
        idx = lax.broadcasted_iota(jnp.int32, y.shape, 1) + t0
        y = jnp.where(idx < t_total, y, 0.0)
    s_ref[...] += jnp.sum(y, axis=1, keepdims=True)
    ss_ref[...] += jnp.sum(y * y, axis=1, keepdims=True)


def _gn_apply_kernel(y_ref, sc_ref, sh_ref, o_ref, *, gelu_approx):
    y = y_ref[...].astype(jnp.float32)
    o_ref[...] = _gelu(y * sc_ref[...] + sh_ref[...], gelu_approx).astype(o_ref.dtype)


def _groupnorm_gelu(y, gamma, beta, *, t_tile=1024, gelu_approx=False):
    """y: [B, T, C] channel-last."""
    B, T, C = y.shape
    tc = 128 if C % 128 == 0 else C                         # lane-dense channel tile
    tt = t_tile if T > t_tile else T                        # multiple of 8 or full T
    n_ct, n_tt = C // tc, pl.cdiv(T, tt)

    s, ss = pl.pallas_call(
        functools.partial(_gn_stats_kernel, t_total=T, t_tile=tt),
        out_shape=(jax.ShapeDtypeStruct((B, 1, C), jnp.float32),
                   jax.ShapeDtypeStruct((B, 1, C), jnp.float32)),
        grid=(B, n_ct, n_tt),
        in_specs=[pl.BlockSpec((1, tt, tc), lambda b, c, t: (b, t, c))],
        out_specs=(pl.BlockSpec((1, 1, tc), lambda b, c, t: (b, 0, c)),
                   pl.BlockSpec((1, 1, tc), lambda b, c, t: (b, 0, c))),
        compiler_params=pltpu.CompilerParams(
            dimension_semantics=("parallel", "parallel", "arbitrary"),
            vmem_limit_bytes=_vmem_limit_bytes()),
    )(y)

    # Tiny [B, 1, C] epilogue math stays in XLA: fold mean / rstd / affine
    # into a per-(b, c) scale & shift so the apply kernel is one FMA + GELU.
    mean = s / float(T)
    var = jnp.maximum(ss / float(T) - mean * mean, 0.0)
    rstd = lax.rsqrt(var + GN_EPS)
    scale = gamma.reshape(1, 1, C).astype(jnp.float32) * rstd
    shift = beta.reshape(1, 1, C).astype(jnp.float32) - mean * scale

    return pl.pallas_call(
        functools.partial(_gn_apply_kernel, gelu_approx=gelu_approx),
        out_shape=jax.ShapeDtypeStruct((B, T, C), y.dtype),
        grid=(B, n_tt, n_ct),
        in_specs=[pl.BlockSpec((1, tt, tc), lambda b, t, c: (b, t, c)),
                  pl.BlockSpec((1, 1, tc), lambda b, t, c: (b, 0, c)),
                  pl.BlockSpec((1, 1, tc), lambda b, t, c: (b, 0, c))],
        out_specs=pl.BlockSpec((1, tt, tc), lambda b, t, c: (b, t, c)),
        compiler_params=pltpu.CompilerParams(
            dimension_semantics=("parallel", "parallel", "parallel"),
            vmem_limit_bytes=_vmem_limit_bytes()),
    )(y, scale, shift)


# --------------------------------------------------------------------------
# Wrapper-side layout plumbing (XLA): k-major im2col + one-time weight packing.
# --------------------------------------------------------------------------
def _extract_patches(h, k, stride):
    """h: [B, T, C_in] -> patches [B*T_out, k*C_in] with (tap, c_in) column
    order, matching the pre-packed weight matrix.  k == stride layers are a
    pure reshape (zero duplication)."""
    B, T, C = h.shape
    t_out = (T - k) // stride + 1
    if k == stride:
        p = h[:, :t_out * k, :].reshape(B, t_out, k * C)
    else:
        # TODO(synk): for overlapping layers (k > stride) an in-kernel
        # accumulation over k shifted strided views of h would remove the
        # k/stride x read amplification of this materialized im2col.
        cols = [lax.slice(h, (0, j, 0), (B, j + stride * (t_out - 1) + 1, C),
                          (1, stride, 1)) for j in range(k)]
        p = jnp.concatenate(cols, axis=-1)                  # [B, t_out, k*C]
    return p.reshape(B * t_out, k * C), t_out


def pack_params(params, conv_layers, mode="default", conv_bias=False,
                compute_dtype=jnp.float32):
    """One-time packing: conv weights [C_out, C_in, k] -> GEMM matrices
    [k*C_in, C_out] with k-major rows, cast to the HBM compute dtype.
    Norm affine params stay f32 (tiny, applied in f32)."""
    packed = {}
    in_d = 1
    for i, (dim, k, _) in enumerate(conv_layers):
        w = params[f"conv{i}_w"]
        packed[f"w{i}"] = (jnp.transpose(w, (2, 1, 0))
                           .reshape(in_d * k, dim).astype(compute_dtype))
        if conv_bias:
            packed[f"b{i}"] = params[f"conv{i}_b"].astype(jnp.float32)
        if mode == "default" and i == 0:
            packed["gn0_g"] = params["gn0_g"].astype(jnp.float32)
            packed["gn0_b"] = params["gn0_b"].astype(jnp.float32)
        if mode == "layer_norm":
            packed[f"ln{i}_g"] = params[f"ln{i}_g"].astype(jnp.float32)
            packed[f"ln{i}_b"] = params[f"ln{i}_b"].astype(jnp.float32)
        in_d = dim
    return packed


def conv_feature_extraction_forward(x, packed, conv_layers, mode="default",
                                    conv_bias=False, compute_dtype=jnp.float32,
                                    row_tile=512, gelu_approx=False):
    """x: [B, T] raw waveform.  Returns [B, C_last, T_last] in x.dtype.

    compute_dtype=jnp.bfloat16 stores activations / patches / weights in bf16
    in HBM (halves the dominant DMA traffic, doubles MXU rate); accumulation
    and norm statistics stay f32.  Expect bf16-level (~1e-2) deviation from
    the f32 reference in that mode."""
    assert mode in ("default", "layer_norm")
    B, _ = x.shape
    h = x.astype(compute_dtype)[:, :, None]                 # [B, T, 1]
    # NOTE: nn.Dropout(p=0.0) is the identity at inference -- omitted.
    for i, (dim, k, stride) in enumerate(conv_layers):
        patches, t_out = _extract_patches(h, k, stride)     # [N, k*C_in]
        bias = packed[f"b{i}"] if conv_bias else None
        is_gn = (mode == "default" and i == 0)
        if mode == "layer_norm":
            y = _conv_gemm(patches, packed[f"w{i}"], bias, epilogue="ln_gelu",
                           ln_g=packed[f"ln{i}_g"], ln_b=packed[f"ln{i}_b"],
                           out_dtype=compute_dtype, row_tile=row_tile,
                           gelu_approx=gelu_approx)
        else:
            y = _conv_gemm(patches, packed[f"w{i}"], bias,
                           epilogue=("none" if is_gn else "gelu"),
                           out_dtype=compute_dtype, row_tile=row_tile,
                           gelu_approx=gelu_approx)
        y = y.reshape(B, t_out, dim)
        if is_gn:
            y = _groupnorm_gelu(y, packed["gn0_g"], packed["gn0_b"],
                                gelu_approx=gelu_approx)
        h = y
    return jnp.transpose(h, (0, 2, 1)).astype(x.dtype)      # [B, C_last, T_last]


# --------------------------------------------------------------------------
# Parameter init mirroring the PyTorch module.
# --------------------------------------------------------------------------
def init_params(key, conv_layers, mode="default", conv_bias=False,
                dtype=jnp.float32):
    params = {}
    in_d = 1
    keys = jax.random.split(key, len(conv_layers))
    for i, (dim, k, _) in enumerate(conv_layers):
        fan_in = in_d * k
        std = math.sqrt(2.0 / fan_in)                       # kaiming_normal_
        params[f"conv{i}_w"] = std * jax.random.normal(keys[i], (dim, in_d, k), dtype)
        if conv_bias:
            params[f"conv{i}_b"] = jnp.zeros((dim,), dtype)
        if mode == "default" and i == 0:
            params["gn0_g"] = jnp.ones((dim,), dtype)
            params["gn0_b"] = jnp.zeros((dim,), dtype)
        if mode == "layer_norm":
            params[f"ln{i}_g"] = jnp.ones((dim,), dtype)
            params[f"ln{i}_b"] = jnp.zeros((dim,), dtype)
        in_d = dim
    return params


# --------------------------------------------------------------------------
# Pure-JAX reference (XLA) for correctness checking.
# --------------------------------------------------------------------------
def _reference_forward(x, params, conv_layers, mode="default", conv_bias=False):
    h = x[:, None, :]                                       # [B, 1, T]
    for i, (dim, k, stride) in enumerate(conv_layers):
        w = params[f"conv{i}_w"]
        h = lax.conv_general_dilated(h, w, (stride,), "VALID",
                                     dimension_numbers=("NCH", "OIH", "NCH"),
                                     precision=lax.Precision.HIGHEST)
        if conv_bias:
            h = h + params[f"conv{i}_b"][None, :, None]
        if mode == "default" and i == 0:
            mean = jnp.mean(h, axis=2, keepdims=True)
            var = jnp.mean((h - mean) ** 2, axis=2, keepdims=True)
            h = (h - mean) / jnp.sqrt(var + GN_EPS)
            h = h * params["gn0_g"][None, :, None] + params["gn0_b"][None, :, None]
        elif mode == "layer_norm":
            mean = jnp.mean(h, axis=1, keepdims=True)
            var = jnp.mean((h - mean) ** 2, axis=1, keepdims=True)
            h = (h - mean) / jnp.sqrt(var + LN_EPS)
            h = h * params[f"ln{i}_g"][None, :, None] + params[f"ln{i}_b"][None, :, None]
        h = jax.nn.gelu(h, approximate=False)
    return h


if __name__ == "__main__":
    # Scaled-down wav2vec2 stack: [(dim, kernel, stride), ...], waveform [B, T].
    conv_layers = [(32, 10, 5), (32, 3, 2), (32, 2, 2)]
    B, T = 2, 160

    key = jax.random.PRNGKey(0)
    kx, kp = jax.random.split(key)
    x = jax.random.normal(kx, (B, T), jnp.float32)

    # ---- mode='default' (GroupNorm on layer 0), f32: tight correctness check.
    params = init_params(kp, conv_layers, mode="default", conv_bias=False)
    ref = _reference_forward(x, params, conv_layers, mode="default", conv_bias=False)

    packed32 = pack_params(params, conv_layers, mode="default", conv_bias=False,
                           compute_dtype=jnp.float32)
    fwd32 = jax.jit(functools.partial(conv_feature_extraction_forward,
                                      conv_layers=conv_layers, mode="default",
                                      conv_bias=False, compute_dtype=jnp.float32))
    out = jax.block_until_ready(fwd32(x, packed32))
    assert out.shape == ref.shape, (out.shape, ref.shape)
    assert jnp.allclose(out, ref, atol=2e-4, rtol=2e-4), \
        f"f32 mismatch, max abs err = {jnp.max(jnp.abs(out - ref))}"

    # ---- bf16-in-HBM deployment path: loose sanity check (bf16-level numerics).
    packed16 = pack_params(params, conv_layers, mode="default", conv_bias=False,
                           compute_dtype=jnp.bfloat16)
    fwd16 = jax.jit(functools.partial(conv_feature_extraction_forward,
                                      conv_layers=conv_layers, mode="default",
                                      conv_bias=False, compute_dtype=jnp.bfloat16))
    out16 = jax.block_until_ready(fwd16(x, packed16))
    assert out16.shape == ref.shape
    assert bool(jnp.all(jnp.isfinite(out16)))
    assert float(jnp.max(jnp.abs(out16 - ref))) < 0.5, "bf16 path diverged"

    # ---- mode='layer_norm' (fused per-timestep LN epilogue), f32.
    params_ln = init_params(kp, conv_layers, mode="layer_norm", conv_bias=False)
    ref_ln = _reference_forward(x, params_ln, conv_layers, mode="layer_norm",
                                conv_bias=False)
    packed_ln = pack_params(params_ln, conv_layers, mode="layer_norm",
                            conv_bias=False, compute_dtype=jnp.float32)
    fwd_ln = jax.jit(functools.partial(conv_feature_extraction_forward,
                                       conv_layers=conv_layers, mode="layer_norm",
                                       conv_bias=False, compute_dtype=jnp.float32))
    out_ln = jax.block_until_ready(fwd_ln(x, packed_ln))
    assert out_ln.shape == ref_ln.shape
    assert jnp.allclose(out_ln, ref_ln, atol=2e-4, rtol=2e-4), \
        f"layer_norm mismatch, max abs err = {jnp.max(jnp.abs(out_ln - ref_ln))}"

    print("KERNEL_OK")
</pallas_src>

<mosaic_0001>
module attributes {stable_mosaic.version = 11 : i64} {
  func.func @_conv_gemm_kernel(%arg0: i32, %arg1: memref<32x10xf32, #tpu.memory_space<vmem>>, %arg2: memref<10x32xf32, #tpu.memory_space<vmem>>, %arg3: memref<32x32xf32, #tpu.memory_space<vmem>>) attributes {dimension_semantics = [#tpu.dimension_semantics<parallel>], iteration_bounds = array<i64: 2>, scalar_prefetch = 0 : i64, scratch_operands = 0 : i64, tpu.core_type = #tpu.core_type<tc>, window_params = [{transform_indices = @transform_0, window_bounds = array<i64: 32, 10>}, {pipeline_mode = #tpu.pipeline_mode<synchronous>, transform_indices = @transform_1, window_bounds = array<i64: 10, 32>}, {transform_indices = @transform_2, window_bounds = array<i64: 32, 32>}]} {
    %c0 = arith.constant 0 : index
    %c0_0 = arith.constant 0 : index
    %0 = vector.load %arg1[%c0, %c0_0] : memref<32x10xf32, #tpu.memory_space<vmem>>, vector<32x10xf32>
    %c0_1 = arith.constant 0 : index
    %c0_2 = arith.constant 0 : index
    %1 = vector.load %arg2[%c0_1, %c0_2] : memref<10x32xf32, #tpu.memory_space<vmem>>, vector<10x32xf32>
    %cst = arith.constant dense<0.000000e+00> : vector<32x32xf32>
    %2 = tpu.matmul %0, %1, %cst {dimension_numbers = #tpu.dot_dimension_numbers<[1], [0], [0], [1], [0, 0, 1, 1], [], []>} : vector<32x10xf32>, vector<10x32xf32>, vector<32x32xf32> -> vector<32x32xf32>
    %c0_3 = arith.constant 0 : index
    %c0_4 = arith.constant 0 : index
    %3 = vector.load %arg3[%c0_3, %c0_4] : memref<32x32xf32, #tpu.memory_space<vmem>>, vector<32x32xf32>
    tpu.vector_store %arg3[%c0_3, %c0_4], %2 {strides = array<i32>} : memref<32x32xf32, #tpu.memory_space<vmem>>, vector<32x32xf32>,
    return
  }
  func.func @transform_0(%arg0: i32) -> (i32, i32) {
    %c0_i32 = arith.constant 0 : i32
    %c0_i32_0 = arith.constant 0 : i32
    return %arg0, %c0_i32 : i32, i32
  }
  func.func @transform_1(%arg0: i32) -> (i32, i32) {
    %c0_i32 = arith.constant 0 : i32
    %c0_i32_0 = arith.constant 0 : i32
    %c0_i32_1 = arith.constant 0 : i32
    return %c0_i32, %c0_i32_0 : i32, i32
  }
  func.func @transform_2(%arg0: i32) -> (i32, i32) {
    %c0_i32 = arith.constant 0 : i32
    %c0_i32_0 = arith.constant 0 : i32
    return %arg0, %c0_i32 : i32, i32
  }
}

module attributes {stable_mosaic.version = 11 : i64} {
  func.func @_gn_stats_kernel(%arg0: i32, %arg1: i32, %arg2: i32, %arg3: memref<1x31x32xf32, #tpu.memory_space<vmem>>, %arg4: memref<1x1x32xf32, #tpu.memory_space<vmem>>, %arg5: memref<1x1x32xf32, #tpu.memory_space<vmem>>) attributes {dimension_semantics = [#tpu.dimension_semantics<parallel>, #tpu.dimension_semantics<parallel>, #tpu.dimension_semantics<arbitrary>], iteration_bounds = array<i64: 2, 1, 1>, scalar_prefetch = 0 : i64, scratch_operands = 0 : i64, tpu.core_type = #tpu.core_type<tc>, window_params = [{transform_indices = @transform_0, window_bounds = array<i64: 1, 31, 32>}, {transform_indices = @transform_1, window_bounds = array<i64: 1, 1, 32>}, {transform_indices = @transform_2, window_bounds = array<i64: 1, 1, 32>}]} {
    %c0_i32 = arith.constant 0 : i32
    %0 = arith.cmpi eq, %arg2, %c0_i32 : i32
    %1 = arith.extui %0 : i1 to i32
    %c0_i32_0 = arith.constant 0 : i32
    %2 = arith.cmpi ne, %1, %c0_i32_0 : i32
    scf.if %2 {
      %cst_16 = arith.constant 0.000000e+00 : f32
      %15 = vector.broadcast %cst_16 : f32 to vector<1x1x32xf32>
      %c0_17 = arith.constant 0 : index
      %c0_18 = arith.constant 0 : index
      %c0_19 = arith.constant 0 : index
      %16 = vector.load %arg4[%c0_17, %c0_18, %c0_19] : memref<1x1x32xf32, #tpu.memory_space<vmem>>, vector<1x1x32xf32>
      tpu.vector_store %arg4[%c0_17, %c0_18, %c0_19], %15 {strides = array<i32>} : memref<1x1x32xf32, #tpu.memory_space<vmem>>, vector<1x1x32xf32>,
      %cst_20 = arith.constant 0.000000e+00 : f32
      %17 = vector.broadcast %cst_20 : f32 to vector<1x1x32xf32>
      %c0_21 = arith.constant 0 : index
      %c0_22 = arith.constant 0 : index
      %c0_23 = arith.constant 0 : index
      %18 = vector.load %arg5[%c0_21, %c0_22, %c0_23] : memref<1x1x32xf32, #tpu.memory_space<vmem>>, vector<1x1x32xf32>
      tpu.vector_store %arg5[%c0_21, %c0_22, %c0_23], %17 {strides = array<i32>} : memref<1x1x32xf32, #tpu.memory_space<vmem>>, vector<1x1x32xf32>,
    } else {
    }
    %c0 = arith.constant 0 : index
    %c0_1 = arith.constant 0 : index
    %c0_2 = arith.constant 0 : index
    %3 = vector.load %arg3[%c0, %c0_1, %c0_2] : memref<1x31x32xf32, #tpu.memory_space<vmem>>, vector<1x31x32xf32>
    %c0_3 = arith.constant 0 : index
    %c0_4 = arith.constant 0 : index
    %c0_5 = arith.constant 0 : index
    %4 = vector.load %arg4[%c0_3, %c0_4, %c0_5] : memref<1x1x32xf32, #tpu.memory_space<vmem>>, vector<1x1x32xf32>
    %cst = arith.constant dense<0.000000e+00> : vector<1x32xf32>
    %5 = vector.multi_reduction <add>, %3, %cst [1] : vector<1x31x32xf32> to vector<1x32xf32>
    %6 = vector.shape_cast %5 : vector<1x32xf32> to vector<1x1x32xf32>
    %7 = arith.addf %4, %6 : vector<1x1x32xf32>
    %c0_6 = arith.constant 0 : index
    %c0_7 = arith.constant 0 : index
    %c0_8 = arith.constant 0 : index
    %8 = vector.load %arg4[%c0_6, %c0_7, %c0_8] : memref<1x1x32xf32, #tpu.memory_space<vmem>>, vector<1x1x32xf32>
    tpu.vector_store %arg4[%c0_6, %c0_7, %c0_8], %7 {strides = array<i32>} : memref<1x1x32xf32, #tpu.memory_space<vmem>>, vector<1x1x32xf32>,
    %c0_9 = arith.constant 0 : index
    %c0_10 = arith.constant 0 : index
    %c0_11 = arith.constant 0 : index
    %9 = vector.load %arg5[%c0_9, %c0_10, %c0_11] : memref<1x1x32xf32, #tpu.memory_space<vmem>>, vector<1x1x32xf32>
    %10 = arith.mulf %3, %3 : vector<1x31x32xf32>
    %cst_12 = arith.constant dense<0.000000e+00> : vector<1x32xf32>
    %11 = vector.multi_reduction <add>, %10, %cst_12 [1] : vector<1x31x32xf32> to vector<1x32xf32>
    %12 = vector.shape_cast %11 : vector<1x32xf32> to vector<1x1x32xf32>
    %13 = arith.addf %9, %12 : vector<1x1x32xf32>
    %c0_13 = arith.constant 0 : index
    %c0_14 = arith.constant 0 : index
    %c0_15 = arith.constant 0 : index
    %14 = vector.load %arg5[%c0_13, %c0_14, %c0_15] : memref<1x1x32xf32, #tpu.memory_space<vmem>>, vector<1x1x32xf32>
    tpu.vector_store %arg5[%c0_13, %c0_14, %c0_15], %13 {strides = array<i32>} : memref<1x1x32xf32, #tpu.memory_space<vmem>>, vector<1x1x32xf32>,
    return
  }
  func.func @transform_0(%arg0: i32, %arg1: i32, %arg2: i32) -> (i32, i32, i32) {
    %c0_i32 = arith.constant 0 : i32
    return %arg0, %arg2, %arg1 : i32, i32, i32
  }
  func.func @transform_1(%arg0: i32, %arg1: i32, %arg2: i32) -> (i32, i32, i32) {
    %c0_i32 = arith.constant 0 : i32
    %c0_i32_0 = arith.constant 0 : i32
    return %arg0, %c0_i32, %arg1 : i32, i32, i32
  }
  func.func @transform_2(%arg0: i32, %arg1: i32, %arg2: i32) -> (i32, i32, i32) {
    %c0_i32 = arith.constant 0 : i32
    %c0_i32_0 = arith.constant 0 : i32
    return %arg0, %c0_i32, %arg1 : i32, i32, i32
  }
}

module attributes {stable_mosaic.version = 11 : i64} {
  func.func @_gn_apply_kernel(%arg0: i32, %arg1: i32, %arg2: i32, %arg3: memref<1x31x32xf32, #tpu.memory_space<vmem>>, %arg4: memref<1x1x32xf32, #tpu.memory_space<vmem>>, %arg5: memref<1x1x32xf32, #tpu.memory_space<vmem>>, %arg6: memref<1x31x32xf32, #tpu.memory_space<vmem>>) attributes {dimension_semantics = [#tpu.dimension_semantics<parallel>, #tpu.dimension_semantics<parallel>, #tpu.dimension_semantics<parallel>], iteration_bounds = array<i64: 2, 1, 1>, scalar_prefetch = 0 : i64, scratch_operands = 0 : i64, tpu.core_type = #tpu.core_type<tc>, window_params = [{transform_indices = @transform_0, window_bounds = array<i64: 1, 31, 32>}, {transform_indices = @transform_1, window_bounds = array<i64: 1, 1, 32>}, {transform_indices = @transform_2, window_bounds = array<i64: 1, 1, 32>}, {transform_indices = @transform_3, window_bounds = array<i64: 1, 31, 32>}]} {
    %c0 = arith.constant 0 : index
    %c0_0 = arith.constant 0 : index
    %c0_1 = arith.constant 0 : index
    %0 = vector.load %arg3[%c0, %c0_0, %c0_1] : memref<1x31x32xf32, #tpu.memory_space<vmem>>, vector<1x31x32xf32>
    %c0_2 = arith.constant 0 : index
    %c0_3 = arith.constant 0 : index
    %c0_4 = arith.constant 0 : index
    %1 = vector.load %arg4[%c0_2, %c0_3, %c0_4] : memref<1x1x32xf32, #tpu.memory_space<vmem>>, vector<1x1x32xf32>
    %2 = vector.broadcast %1 : vector<1x1x32xf32> to vector<1x31x32xf32>
    %3 = arith.mulf %0, %2 : vector<1x31x32xf32>
    %c0_5 = arith.constant 0 : index
    %c0_6 = arith.constant 0 : index
    %c0_7 = arith.constant 0 : index
    %4 = vector.load %arg5[%c0_5, %c0_6, %c0_7] : memref<1x1x32xf32, #tpu.memory_space<vmem>>, vector<1x1x32xf32>
    %5 = vector.broadcast %4 : vector<1x1x32xf32> to vector<1x31x32xf32>
    %6 = arith.addf %3, %5 : vector<1x31x32xf32>
    %cst = arith.constant 5.000000e-01 : f32
    %7 = vector.broadcast %cst : f32 to vector<1x31x32xf32>
    %8 = arith.mulf %7, %6 : vector<1x31x32xf32>
    %cst_8 = arith.constant 0.707106769 : f32
    %9 = vector.broadcast %cst_8 : f32 to vector<1x31x32xf32>
    %10 = arith.mulf %6, %9 : vector<1x31x32xf32>
    %11 = math.absf %10 : vector<1x31x32xf32>
    %cst_9 = arith.constant 0.327591091 : f32
    %12 = vector.broadcast %cst_9 : f32 to vector<1x31x32xf32>
    %13 = arith.mulf %12, %11 : vector<1x31x32xf32>
    %cst_10 = arith.constant 1.000000e+00 : f32
    %14 = vector.broadcast %cst_10 : f32 to vector<1x31x32xf32>
    %15 = arith.addf %14, %13 : vector<1x31x32xf32>
    %cst_11 = arith.constant 1.000000e+00 : f32
    %16 = vector.broadcast %cst_11 : f32 to vector<1x31x32xf32>
    %17 = arith.divf %16, %15 : vector<1x31x32xf32>
    %cst_12 = arith.constant 1.06140542 : f32
    %18 = vector.broadcast %cst_12 : f32 to vector<1x31x32xf32>
    %19 = arith.mulf %17, %18 : vector<1x31x32xf32>
    %cst_13 = arith.constant -1.45315206 : f32
    %20 = vector.broadcast %cst_13 : f32 to vector<1x31x32xf32>
    %21 = arith.addf %20, %19 : vector<1x31x32xf32>
    %22 = arith.mulf %17, %21 : vector<1x31x32xf32>
    %cst_14 = arith.constant 1.42141378 : f32
    %23 = vector.broadcast %cst_14 : f32 to vector<1x31x32xf32>
    %24 = arith.addf %23, %22 : vector<1x31x32xf32>
    %25 = arith.mulf %17, %24 : vector<1x31x32xf32>
    %cst_15 = arith.constant -0.284496725 : f32
    %26 = vector.broadcast %cst_15 : f32 to vector<1x31x32xf32>
    %27 = arith.addf %26, %25 : vector<1x31x32xf32>
    %28 = arith.mulf %17, %27 : vector<1x31x32xf32>
    %cst_16 = arith.constant 0.254829586 : f32
    %29 = vector.broadcast %cst_16 : f32 to vector<1x31x32xf32>
    %30 = arith.addf %29, %28 : vector<1x31x32xf32>
    %31 = arith.mulf %17, %30 : vector<1x31x32xf32>
    %cst_17 = arith.constant 0.000000e+00 : f32
    %32 = vector.broadcast %cst_17 : f32 to vector<1x31x32xf32>
    %33 = arith.subf %32, %11 : vector<1x31x32xf32>
    %34 = arith.mulf %33, %11 : vector<1x31x32xf32>
    %35 = math.exp %34 : vector<1x31x32xf32>
    %36 = arith.mulf %31, %35 : vector<1x31x32xf32>
    %cst_18 = arith.constant 1.000000e+00 : f32
    %37 = vector.broadcast %cst_18 : f32 to vector<1x31x32xf32>
    %38 = arith.subf %37, %36 : vector<1x31x32xf32>
    %cst_19 = arith.constant 0.000000e+00 : f32
    %39 = vector.broadcast %cst_19 : f32 to vector<1x31x32xf32>
    %40 = arith.cmpf oge, %10, %39 : vector<1x31x32xf32>
    %cst_20 = arith.constant 0.000000e+00 : f32
    %41 = vector.broadcast %cst_20 : f32 to vector<1x31x32xf32>
    %42 = arith.subf %41, %38 : vector<1x31x32xf32>
    %43 = arith.select %40, %38, %42 : vector<1x31x32xi1>, vector<1x31x32xf32>
    %cst_21 = arith.constant 1.000000e+00 : f32
    %44 = vector.broadcast %cst_21 : f32 to vector<1x31x32xf32>
    %45 = arith.addf %44, %43 : vector<1x31x32xf32>
    %46 = arith.mulf %8, %45 : vector<1x31x32xf32>
    %c0_22 = arith.constant 0 : index
    %c0_23 = arith.constant 0 : index
    %c0_24 = arith.constant 0 : index
    %47 = vector.load %arg6[%c0_22, %c0_23, %c0_24] : memref<1x31x32xf32, #tpu.memory_space<vmem>>, vector<1x31x32xf32>
    tpu.vector_store %arg6[%c0_22, %c0_23, %c0_24], %46 {strides = array<i32>} : memref<1x31x32xf32, #tpu.memory_space<vmem>>, vector<1x31x32xf32>,
    return
  }
  func.func @transform_0(%arg0: i32, %arg1: i32, %arg2: i32) -> (i32, i32, i32) {
    %c0_i32 = arith.constant 0 : i32
    return %arg0, %arg1, %arg2 : i32, i32, i32
  }
  func.func @transform_1(%arg0: i32, %arg1: i32, %arg2: i32) -> (i32, i32, i32) {
    %c0_i32 = arith.constant 0 : i32
    %c0_i32_0 = arith.constant 0 : i32
    return %arg0, %c0_i32, %arg2 : i32, i32, i32
  }
  func.func @transform_2(%arg0: i32, %arg1: i32, %arg2: i32) -> (i32, i32, i32) {
    %c0_i32 = arith.constant 0 : i32
    %c0_i32_0 = arith.constant 0 : i32
    return %arg0, %c0_i32, %arg2 : i32, i32, i32
  }
  func.func @transform_3(%arg0: i32, %arg1: i32, %arg2: i32) -> (i32, i32, i32) {
    %c0_i32 = arith.constant 0 : i32
    return %arg0, %arg1, %arg2 : i32, i32, i32
  }
}

module attributes {stable_mosaic.version = 11 : i64} {
  func.func @_conv_gemm_kernel(%arg0: i32, %arg1: memref<16x96xf32, #tpu.memory_space<vmem>>, %arg2: memref<96x32xf32, #tpu.memory_space<vmem>>, %arg3: memref<16x32xf32, #tpu.memory_space<vmem>>) attributes {dimension_semantics = [#tpu.dimension_semantics<parallel>], iteration_bounds = array<i64: 2>, scalar_prefetch = 0 : i64, scratch_operands = 0 : i64, tpu.core_type = #tpu.core_type<tc>, window_params = [{transform_indices = @transform_0, window_bounds = array<i64: 16, 96>}, {pipeline_mode = #tpu.pipeline_mode<synchronous>, transform_indices = @transform_1, window_bounds = array<i64: 96, 32>}, {transform_indices = @transform_2, window_bounds = array<i64: 16, 32>}]} {
    %c0 = arith.constant 0 : index
    %c0_0 = arith.constant 0 : index
    %0 = vector.load %arg1[%c0, %c0_0] : memref<16x96xf32, #tpu.memory_space<vmem>>, vector<16x96xf32>
    %c0_1 = arith.constant 0 : index
    %c0_2 = arith.constant 0 : index
    %1 = vector.load %arg2[%c0_1, %c0_2] : memref<96x32xf32, #tpu.memory_space<vmem>>, vector<96x32xf32>
    %cst = arith.constant dense<0.000000e+00> : vector<16x32xf32>
    %2 = tpu.matmul %0, %1, %cst {dimension_numbers = #tpu.dot_dimension_numbers<[1], [0], [0], [1], [0, 0, 1, 1], [], []>} : vector<16x96xf32>, vector<96x32xf32>, vector<16x32xf32> -> vector<16x32xf32>
    %cst_3 = arith.constant 5.000000e-01 : f32
    %3 = vector.broadcast %cst_3 : f32 to vector<16x32xf32>
    %4 = arith.mulf %3, %2 : vector<16x32xf32>
    %cst_4 = arith.constant 0.707106769 : f32
    %5 = vector.broadcast %cst_4 : f32 to vector<16x32xf32>
    %6 = arith.mulf %2, %5 : vector<16x32xf32>
    %7 = math.absf %6 : vector<16x32xf32>
    %cst_5 = arith.constant 0.327591091 : f32
    %8 = vector.broadcast %cst_5 : f32 to vector<16x32xf32>
    %9 = arith.mulf %8, %7 : vector<16x32xf32>
    %cst_6 = arith.constant 1.000000e+00 : f32
    %10 = vector.broadcast %cst_6 : f32 to vector<16x32xf32>
    %11 = arith.addf %10, %9 : vector<16x32xf32>
    %cst_7 = arith.constant 1.000000e+00 : f32
    %12 = vector.broadcast %cst_7 : f32 to vector<16x32xf32>
    %13 = arith.divf %12, %11 : vector<16x32xf32>
    %cst_8 = arith.constant 1.06140542 : f32
    %14 = vector.broadcast %cst_8 : f32 to vector<16x32xf32>
    %15 = arith.mulf %13, %14 : vector<16x32xf32>
    %cst_9 = arith.constant -1.45315206 : f32
    %16 = vector.broadcast %cst_9 : f32 to vector<16x32xf32>
    %17 = arith.addf %16, %15 : vector<16x32xf32>
    %18 = arith.mulf %13, %17 : vector<16x32xf32>
    %cst_10 = arith.constant 1.42141378 : f32
    %19 = vector.broadcast %cst_10 : f32 to vector<16x32xf32>
    %20 = arith.addf %19, %18 : vector<16x32xf32>
    %21 = arith.mulf %13, %20 : vector<16x32xf32>
    %cst_11 = arith.constant -0.284496725 : f32
    %22 = vector.broadcast %cst_11 : f32 to vector<16x32xf32>
    %23 = arith.addf %22, %21 : vector<16x32xf32>
    %24 = arith.mulf %13, %23 : vector<16x32xf32>
    %cst_12 = arith.constant 0.254829586 : f32
    %25 = vector.broadcast %cst_12 : f32 to vector<16x32xf32>
    %26 = arith.addf %25, %24 : vector<16x32xf32>
    %27 = arith.mulf %13, %26 : vector<16x32xf32>
    %cst_13 = arith.constant 0.000000e+00 : f32
    %28 = vector.broadcast %cst_13 : f32 to vector<16x32xf32>
    %29 = arith.subf %28, %7 : vector<16x32xf32>
    %30 = arith.mulf %29, %7 : vector<16x32xf32>
    %31 = math.exp %30 : vector<16x32xf32>
    %32 = arith.mulf %27, %31 : vector<16x32xf32>
    %cst_14 = arith.constant 1.000000e+00 : f32
    %33 = vector.broadcast %cst_14 : f32 to vector<16x32xf32>
    %34 = arith.subf %33, %32 : vector<16x32xf32>
    %cst_15 = arith.constant 0.000000e+00 : f32
    %35 = vector.broadcast %cst_15 : f32 to vector<16x32xf32>
    %36 = arith.cmpf oge, %6, %35 : vector<16x32xf32>
    %cst_16 = arith.constant 0.000000e+00 : f32
    %37 = vector.broadcast %cst_16 : f32 to vector<16x32xf32>
    %38 = arith.subf %37, %34 : vector<16x32xf32>
    %39 = arith.select %36, %34, %38 : vector<16x32xi1>, vector<16x32xf32>
    %cst_17 = arith.constant 1.000000e+00 : f32
    %40 = vector.broadcast %cst_17 : f32 to vector<16x32xf32>
    %41 = arith.addf %40, %39 : vector<16x32xf32>
    %42 = arith.mulf %4, %41 : vector<16x32xf32>
    %c0_18 = arith.constant 0 : index
    %c0_19 = arith.constant 0 : index
    %43 = vector.load %arg3[%c0_18, %c0_19] : memref<16x32xf32, #tpu.memory_space<vmem>>, vector<16x32xf32>
    tpu.vector_store %arg3[%c0_18, %c0_19], %42 {strides = array<i32>} : memref<16x32xf32, #tpu.memory_space<vmem>>, vector<16x32xf32>,
    return
  }
  func.func @transform_0(%arg0: i32) -> (i32, i32) {
    %c0_i32 = arith.constant 0 : i32
    %c0_i32_0 = arith.constant 0 : i32
    return %arg0, %c0_i32 : i32, i32
  }
  func.func @transform_1(%arg0: i32) -> (i32, i32) {
    %c0_i32 = arith.constant 0 : i32
    %c0_i32_0 = arith.constant 0 : i32
    %c0_i32_1 = arith.constant 0 : i32
    return %c0_i32, %c0_i32_0 : i32, i32
  }
  func.func @transform_2(%arg0: i32) -> (i32, i32) {
    %c0_i32 = arith.constant 0 : i32
    %c0_i32_0 = arith.constant 0 : i32
    return %arg0, %c0_i32 : i32, i32
  }
}

module attributes {stable_mosaic.version = 11 : i64} {
  func.func @_conv_gemm_kernel(%arg0: i32, %arg1: memref<8x64xf32, #tpu.memory_space<vmem>>, %arg2: memref<64x32xf32, #tpu.memory_space<vmem>>, %arg3: memref<8x32xf32, #tpu.memory_space<vmem>>) attributes {dimension_semantics = [#tpu.dimension_semantics<parallel>], iteration_bounds = array<i64: 2>, scalar_prefetch = 0 : i64, scratch_operands = 0 : i64, tpu.core_type = #tpu.core_type<tc>, window_params = [{transform_indices = @transform_0, window_bounds = array<i64: 8, 64>}, {pipeline_mode = #tpu.pipeline_mode<synchronous>, transform_indices = @transform_1, window_bounds = array<i64: 64, 32>}, {transform_indices = @transform_2, window_bounds = array<i64: 8, 32>}]} {
    %c0 = arith.constant 0 : index
    %c0_0 = arith.constant 0 : index
    %0 = vector.load %arg1[%c0, %c0_0] : memref<8x64xf32, #tpu.memory_space<vmem>>, vector<8x64xf32>
    %c0_1 = arith.constant 0 : index
    %c0_2 = arith.constant 0 : index
    %1 = vector.load %arg2[%c0_1, %c0_2] : memref<64x32xf32, #tpu.memory_space<vmem>>, vector<64x32xf32>
    %cst = arith.constant dense<0.000000e+00> : vector<8x32xf32>
    %2 = tpu.matmul %0, %1, %cst {dimension_numbers = #tpu.dot_dimension_numbers<[1], [0], [0], [1], [0, 0, 1, 1], [], []>} : vector<8x64xf32>, vector<64x32xf32>, vector<8x32xf32> -> vector<8x32xf32>
    %cst_3 = arith.constant 5.000000e-01 : f32
    %3 = vector.broadcast %cst_3 : f32 to vector<8x32xf32>
    %4 = arith.mulf %3, %2 : vector<8x32xf32>
    %cst_4 = arith.constant 0.707106769 : f32
    %5 = vector.broadcast %cst_4 : f32 to vector<8x32xf32>
    %6 = arith.mulf %2, %5 : vector<8x32xf32>
    %7 = math.absf %6 : vector<8x32xf32>
    %cst_5 = arith.constant 0.327591091 : f32
    %8 = vector.broadcast %cst_5 : f32 to vector<8x32xf32>
    %9 = arith.mulf %8, %7 : vector<8x32xf32>
    %cst_6 = arith.constant 1.000000e+00 : f32
    %10 = vector.broadcast %cst_6 : f32 to vector<8x32xf32>
    %11 = arith.addf %10, %9 : vector<8x32xf32>
    %cst_7 = arith.constant 1.000000e+00 : f32
    %12 = vector.broadcast %cst_7 : f32 to vector<8x32xf32>
    %13 = arith.divf %12, %11 : vector<8x32xf32>
    %cst_8 = arith.constant 1.06140542 : f32
    %14 = vector.broadcast %cst_8 : f32 to vector<8x32xf32>
    %15 = arith.mulf %13, %14 : vector<8x32xf32>
    %cst_9 = arith.constant -1.45315206 : f32
    %16 = vector.broadcast %cst_9 : f32 to vector<8x32xf32>
    %17 = arith.addf %16, %15 : vector<8x32xf32>
    %18 = arith.mulf %13, %17 : vector<8x32xf32>
    %cst_10 = arith.constant 1.42141378 : f32
    %19 = vector.broadcast %cst_10 : f32 to vector<8x32xf32>
    %20 = arith.addf %19, %18 : vector<8x32xf32>
    %21 = arith.mulf %13, %20 : vector<8x32xf32>
    %cst_11 = arith.constant -0.284496725 : f32
    %22 = vector.broadcast %cst_11 : f32 to vector<8x32xf32>
    %23 = arith.addf %22, %21 : vector<8x32xf32>
    %24 = arith.mulf %13, %23 : vector<8x32xf32>
    %cst_12 = arith.constant 0.254829586 : f32
    %25 = vector.broadcast %cst_12 : f32 to vector<8x32xf32>
    %26 = arith.addf %25, %24 : vector<8x32xf32>
    %27 = arith.mulf %13, %26 : vector<8x32xf32>
    %cst_13 = arith.constant 0.000000e+00 : f32
    %28 = vector.broadcast %cst_13 : f32 to vector<8x32xf32>
    %29 = arith.subf %28, %7 : vector<8x32xf32>
    %30 = arith.mulf %29, %7 : vector<8x32xf32>
    %31 = math.exp %30 : vector<8x32xf32>
    %32 = arith.mulf %27, %31 : vector<8x32xf32>
    %cst_14 = arith.constant 1.000000e+00 : f32
    %33 = vector.broadcast %cst_14 : f32 to vector<8x32xf32>
    %34 = arith.subf %33, %32 : vector<8x32xf32>
    %cst_15 = arith.constant 0.000000e+00 : f32
    %35 = vector.broadcast %cst_15 : f32 to vector<8x32xf32>
    %36 = arith.cmpf oge, %6, %35 : vector<8x32xf32>
    %cst_16 = arith.constant 0.000000e+00 : f32
    %37 = vector.broadcast %cst_16 : f32 to vector<8x32xf32>
    %38 = arith.subf %37, %34 : vector<8x32xf32>
    %39 = arith.select %36, %34, %38 : vector<8x32xi1>, vector<8x32xf32>
    %cst_17 = arith.constant 1.000000e+00 : f32
    %40 = vector.broadcast %cst_17 : f32 to vector<8x32xf32>
    %41 = arith.addf %40, %39 : vector<8x32xf32>
    %42 = arith.mulf %4, %41 : vector<8x32xf32>
    %c0_18 = arith.constant 0 : index
    %c0_19 = arith.constant 0 : index
    %43 = vector.load %arg3[%c0_18, %c0_19] : memref<8x32xf32, #tpu.memory_space<vmem>>, vector<8x32xf32>
    tpu.vector_store %arg3[%c0_18, %c0_19], %42 {strides = array<i32>} : memref<8x32xf32, #tpu.memory_space<vmem>>, vector<8x32xf32>,
    return
  }
  func.func @transform_0(%arg0: i32) -> (i32, i32) {
    %c0_i32 = arith.constant 0 : i32
    %c0_i32_0 = arith.constant 0 : i32
    return %arg0, %c0_i32 : i32, i32
  }
  func.func @transform_1(%arg0: i32) -> (i32, i32) {
    %c0_i32 = arith.constant 0 : i32
    %c0_i32_0 = arith.constant 0 : i32
    %c0_i32_1 = arith.constant 0 : i32
    return %c0_i32, %c0_i32_0 : i32, i32
  }
  func.func @transform_2(%arg0: i32) -> (i32, i32) {
    %c0_i32 = arith.constant 0 : i32
    %c0_i32_0 = arith.constant 0 : i32
    return %arg0, %c0_i32 : i32, i32
  }
}

</mosaic_0001>

<llo_original>
// kernel: conv_feature_extraction_forward.6
$region0: #{conv_feature_extraction_forward.6}
  #allocation0 [shape = 'u32[]', space=smem, size = 0x4, offset = 0x4, fixed_abs, tag = 'smem constant byte address 0x4 - core index']
  #allocation1 [shape = 'u32[144,128]{1,0:T(1,128)}', space=vmem, size = 0x12000, scoped, tag = 'internal scratch']
  %s0 = inlined_call_operand.hbm [shape: f32[2,31,32], index: 0, kind: input, shape index: {}]
  %s1 = inlined_call_operand.hbm [shape: f32[2,1,32], index: 1, kind: output, shape index: {0}]
  %s2 = inlined_call_operand.hbm [shape: f32[2,1,32], index: 2, kind: output, shape index: {1}]
  %3 = xla_tuple %s1, %s2
  %s4 = sld [smem:[#allocation0]]
  $region53: #{conv_feature_extraction_forward.6} parent=0
    _
  %s6 = ssub.s32 1, %s4
  %s7 = scalar_select 0, %s6, %s4
  $region1: #{conv_feature_extraction_forward.6} parent=0
    #allocation2 [shape = 'u8[32768]{0}', space=vmem, size = 0x8000, scoped, tag = 'input window, operand 0']
    #allocation3 [shape = 's32[2]{0}', space=sflag, size = 0x8, scoped, tag = 'scoped memory for conv_feature_extraction_forward.6']
    #allocation4 [shape = 's32[2]{0}', space=sflag, size = 0x8, scoped, tag = 'scoped memory for conv_feature_extraction_forward.6']
    #allocation5 [shape = 'u8[1024]{0}', space=vmem, size = 0x400, scoped, tag = 'output window, operand 0']
    #allocation6 [shape = 'u8[1024]{0}', space=vmem, size = 0x400, scoped, tag = 'output window, operand 1']
    #allocation7 [shape = 's32[2]{0}', space=sflag, size = 0x8, scoped, tag = 'scoped memory for conv_feature_extraction_forward.6']
    %8 = vsyncpa [#allocation3], 0
    %s9 = scalar_lea.sflag [#allocation3], 1
    %10 = vsyncpa %s9, 0
    %11 = vsyncpa [#allocation4], 0
    %s12 = scalar_lea.sflag [#allocation4], 1
    %13 = vsyncpa %s12, 0
    %14 = vsyncpa [#allocation7], 0
    %s15 = scalar_lea.sflag [#allocation7], 1
    %16 = vsyncpa %s15, 0
    loop: start=0, step=1, limit=4
    $region2: #{conv_feature_extraction_forward.6} parent=1 // loop_pre_header
      _
    $region3: #{conv_feature_extraction_forward.6} parent=1 // loop_header
      %s18 = sphi 0, %s22
      %p19 = scmp.ge.s32.totalorder %s18, 4
      %s25 = sphi 0, %s44
      %s26 = sphi 0, %s40
      %s27 = sphi 0, %s36
      %s28 = sphi 0, %s25
      %s29 = sphi 0, %s26
      %s30 = sphi 0, %s27
      %s31 = sphi 0, %s28
      %s32 = sphi 0, %s29
      %s33 = sphi 0, %s30
      %s51 = sphi 0, %s53
      %s54 = sphi 0, %s51
      %s55 = sphi 0, %s54
      %s71 = sphi 0, %s55
      %s79 = sphi 0, %s81
      %s82 = sphi 0, %s79
      %s83 = sphi 0, %s82
      %s99 = sphi 0, %s83
      %s107 = sphi 0, %s109
      %s110 = sphi 0, %s107
      %s111 = sphi 0, %s110
      %s127 = sphi 0, %s111
    $region4: #{conv_feature_extraction_forward.6} parent=1 // loop_header_branch
      %21 = sbr.rel (%p19) target = $region8
    $region5: #{conv_feature_extraction_forward.6} parent=1 // loop_body
      %s23 = ssub.s32 %s18, 1
      %s24 = ssub.s32 %s18, 2
      %s34 = sadd.s32 1, %s27
      %p35 = scmp.ge.s32.totalorder %s34, 1
      %s36 = scalar_select %p35, 0, %s34
      %s37 = sadd.s32 1, %s26
      %s38 = scalar_select %p35, %s37, %s26
      %p39 = scmp.ge.s32.totalorder %s38, 1
      %s40 = scalar_select %p39, 0, %s38
      %s41 = sadd.s32 1, %s25
      %s42 = scalar_select %p39, %s41, %s25
      %p43 = scmp.ge.s32.totalorder %s42, 2
      %s44 = scalar_select %p43, 0, %s42
      %s45 = ssub.s32 %s25, %s44
      %s46 = ssub.s32 %s27, %s36
      %s47 = sor.u32 %s45, %s46
      %s48 = ssub.s32 %s26, %s40
      %s49 = sor.u32 %s47, %s48
      %p50 = scmp.eq.s32.totalorder %s49, 0
      %s52 = sadd.s32 %s51, 1
      %s53 = scalar_select %p50, %s51, %s52
      %p56 = pneg %p50
      %p57 = scmp.eq.s32.totalorder %s18, 1
      %p58 = por %p56, %p57
      %p59 = scmp.ne.s32.totalorder %s51, %s54
      %p60 = scmp.eq.s32.totalorder %s18, 0
      %p61 = por %p59, %p60
      %p62 = scmp.ne.s32.totalorder %s51, %s54
      %p63 = scmp.eq.s32.totalorder %s23, 1
      %p64 = por %p62, %p63
      %p65 = scmp.ne.s32.totalorder %s54, %s55
      %p66 = scmp.eq.s32.totalorder %s23, 0
      %p67 = por %p65, %p66
      %p68 = scmp.ne.s32.totalorder %s54, %s55
      %p69 = scmp.eq.s32.totalorder %s24, 1
      %p70 = por %p68, %p69
      %p72 = scmp.ne.s32.totalorder %s55, %s71
      %p73 = scmp.eq.s32.totalorder %s24, 0
      %p74 = por %p72, %p73
      %s75 = ssub.s32 %s25, %s44
      %s76 = ssub.s32 %s26, %s40
      %s77 = sor.u32 %s75, %s76
      %p78 = scmp.eq.s32.totalorder %s77, 0
      %s80 = sadd.s32 %s79, 1
      %s81 = scalar_select %p78, %s79, %s80
      %p84 = pneg %p78
      %p85 = scmp.eq.s32.totalorder %s18, 1
      %p86 = por %p84, %p85
      %p87 = scmp.ne.s32.totalorder %s79, %s82
      %p88 = scmp.eq.s32.totalorder %s18, 0
      %p89 = por %p87, %p88
      %p90 = scmp.ne.s32.totalorder %s79, %s82
      %p91 = scmp.eq.s32.totalorder %s23, 1
      %p92 = por %p90, %p91
      %p93 = scmp.ne.s32.totalorder %s82, %s83
      %p94 = scmp.eq.s32.totalorder %s23, 0
      %p95 = por %p93, %p94
      %p96 = scmp.ne.s32.totalorder %s82, %s83
      %p97 = scmp.eq.s32.totalorder %s24, 1
      %p98 = por %p96, %p97
      %p100 = scmp.ne.s32.totalorder %s83, %s99
      %p101 = scmp.eq.s32.totalorder %s24, 0
      %p102 = por %p100, %p101
      %s103 = ssub.s32 %s25, %s44
      %s104 = ssub.s32 %s26, %s40
      %s105 = sor.u32 %s103, %s104
      %p106 = scmp.eq.s32.totalorder %s105, 0
      %s108 = sadd.s32 %s107, 1
      %s109 = scalar_select %p106, %s107, %s108
      %p112 = pneg %p106
      %p113 = scmp.eq.s32.totalorder %s18, 1
      %p114 = por %p112, %p113
      %p115 = scmp.ne.s32.totalorder %s107, %s110
      %p116 = scmp.eq.s32.totalorder %s18, 0
      %p117 = por %p115, %p116
      %p118 = scmp.ne.s32.totalorder %s107, %s110
      %p119 = scmp.eq.s32.totalorder %s23, 1
      %p120 = por %p118, %p119
      %p121 = scmp.ne.s32.totalorder %s110, %s111
      %p122 = scmp.eq.s32.totalorder %s23, 0
      %p123 = por %p121, %p122
      %p124 = scmp.ne.s32.totalorder %s110, %s111
      %p125 = scmp.eq.s32.totalorder %s24, 1
      %p126 = por %p124, %p125
      %p128 = scmp.ne.s32.totalorder %s111, %s127
      %p129 = scmp.eq.s32.totalorder %s24, 0
      %p130 = por %p128, %p129
      %p131 = scmp.le.s32.totalorder 1, %s18
      %p132 = scmp.lt.s32.totalorder %s18, 3
      %p133 = pnand %p131, %p132
      %p134 = pneg %p133
      // Predicated region
      $region9: #{conv_feature_extraction_forward.6} parent=5 // pred_check
        _
      $region10: #{conv_feature_extraction_forward.6} parent=5 // pred_check_branch
        %136 = sbr.rel (%p133) target = $region12
      $region11: #{conv_feature_extraction_forward.6} parent=5 // pred_region
        %s137 = ssub.s32 %s18, 1
      $region12: #{conv_feature_extraction_forward.6} parent=5 // pred_fallthru
        _
      %p138 = scmp.lt.s32.totalorder %s18, 2
      // Predicated region
      $region13: #{conv_feature_extraction_forward.6} parent=5 // pred_check
        %p139 = pneg %p138
      $region14: #{conv_feature_extraction_forward.6} parent=5 // pred_check_branch
        %141 = sbr.rel (%p139) target = $region16
      $region15: #{conv_feature_extraction_forward.6} parent=5 // pred_region
        // Predicated region
        $region17: #{conv_feature_extraction_forward.6} parent=15 // pred_check
          %p142 = pneg %p61
        $region18: #{conv_feature_extraction_forward.6} parent=15 // pred_check_branch
          %144 = sbr.rel (%p142) target = $region20
        $region19: #{conv_feature_extraction_forward.6} parent=15 // pred_region
          %s145 = sand.u32 %s51, 1
          %s146 = scalar_lea.sflag [#allocation3], %s145
          %s147 = sand.u32 %s51, 1
          %s148 = smul.addr %s147, 32
          %s149 = scalar_lea.vmem [#allocation2], %s148
          %s150 = smul.u32 4, %s27
          %s152 = ssub.s32 512, 512
          %153 = vsyncadd %s146, %s152
          %s154 = sadd.s32 %s26, %s150
          %s155 = smul.addr %s25, 4
          %s156 = sadd.s32 %s154, %s155
          %s157 = smul.addr %s156, 128
          %s158 = scalar_lea.hbm %s0, %s157
          %s159 = sshll.u32 %s149, 4
          %s160 = int_to_ptr.vmem [resolvable:$true] %s159
          %165 = dma.hbm_to_vmem [thread:$0]  %s158, 512, %s160, %s146, 128, 128, 8
        $region20: #{conv_feature_extraction_forward.6} parent=15 // pred_fallthru
          _
      $region16: #{conv_feature_extraction_forward.6} parent=5 // pred_fallthru
        _
      %p166 = scmp.le.s32.totalorder 1, %s18
      %p167 = scmp.lt.s32.totalorder %s18, 3
      %p168 = pnand %p166, %p167
      %p169 = pneg %p168
      // Predicated region
      $region21: #{conv_feature_extraction_forward.6} parent=5 // pred_check
        _
      $region22: #{conv_feature_extraction_forward.6} parent=5 // pred_check_branch
        %171 = sbr.rel (%p168) target = $region24
      $region23: #{conv_feature_extraction_forward.6} parent=5 // pred_region
        %s172 = ssub.s32 %s18, 1
        %s173 = sand.u32 %s54, 1
        %s174 = scalar_lea.sflag [#allocation3], %s173
        %s175 = sand.u32 %s54, 1
        %s176 = smul.addr %s175, 32
        %s177 = scalar_lea.vmem [#allocation2], %s176
        // Predicated region
        $region25: #{conv_feature_extraction_forward.6} parent=23 // pred_check
          %p178 = pneg %p67
        $region26: #{conv_feature_extraction_forward.6} parent=23 // pred_check_branch
          %180 = sbr.rel (%p178) target = $region28
        $region27: #{conv_feature_extraction_forward.6} parent=23 // pred_region
          %181 = dma.done %s174, 512
        $region28: #{conv_feature_extraction_forward.6} parent=23 // pred_fallthru
          _
        %s182 = sand.u32 %s54, 1
        %s183 = scalar_lea.sflag [#allocation3], %s182
        %s184 = sand.u32 %s54, 1
        %s185 = smul.addr %s184, 32
        %s186 = scalar_lea.vmem [#allocation2], %s185
        %p187 = pneg %p67
        %p188 = pneg %p64
        %p189 = pneg %p95
        %p190 = pneg %p92
        %s191 = sand.u32 %s82, 1
        %s192 = scalar_lea.sflag [#allocation4], %s191
        %s193 = sand.u32 %s82, 1
        %s194 = scalar_lea.vmem [#allocation5], %s193
        %p195 = pneg %p123
        %p196 = pneg %p120
        %s197 = sand.u32 %s110, 1
        %s198 = scalar_lea.sflag [#allocation7], %s197
        %s199 = sand.u32 %s110, 1
        %s200 = scalar_lea.vmem [#allocation6], %s199
        %s201 = smul.u32 4, %s30
        %p202 = scmp.eq.s32.totalorder %s30, 0
        // Predicated region
        $region29: #{conv_feature_extraction_forward.6} parent=23 // pred_check
          %p203 = pneg %p202
        $region30: #{conv_feature_extraction_forward.6} parent=23 // pred_check_branch
          %205 = sbr.rel (%p203) target = $region32
        $region31: #{conv_feature_extraction_forward.6} parent=23 // pred_region
          %vm206 = vcmask 253952
          %207 = vst.msk [vmem:[%s194] sm:$0x1] %vm206, 0.0
          %208 = vst.msk [vmem:[%s200] sm:$0x1] %vm206, 0.0
        $region32: #{conv_feature_extraction_forward.6} parent=23 // pred_fallthru
          _
        %v209 = vld [vmem:[%s177] sm:$0xff]
        %v210 = vld [vmem:[%s177 + $0x8] sm:$0xff]
        %v211 = vld [vmem:[%s177 + $0x10] sm:$0xff]
        %v212 = vld [vmem:[%s177 + $0x18] sm:$0x7f]
        %v213 = vld [vmem:[%s194] sm:$0x1]
        %vm214 = vcmask 261120
        %v215 = vsel %vm214, %v209, 0.0
        %v216 = vsel %vm214, %v210, 0.0
        %v217 = vadd.f32 %v215, %v216
        %v218 = vsel %vm214, %v211, 0.0
        %v219 = vadd.f32 %v217, %v218
        %vm220 = vcmask 260096
        %v221 = vsel %vm220, %v212, 0.0
        %v222 = vadd.f32 %v219, %v221
        %v223 = vrot.slane %v222, 4
        %v224 = vadd.f32 %v222, %v223
        %v225 = vrot.slane %v224, 2
        %v226 = vadd.f32 %v224, %v225
        %v227 = vrot.slane %v226, 1
        %v228 = vadd.f32 %v226, %v227
        %v229 = vadd.f32 %v213, %v228
        %vm230 = vcmask 253952
        %231 = vst.msk [vmem:[%s194] sm:$0x1] %vm230, %v229
        %v232 = vld [vmem:[%s200] sm:$0x1]
        %v233 = vmul.f32 %v209, %v209
        %v234 = vmul.f32 %v210, %v210
        %v235 = vmul.f32 %v211, %v211
        %v236 = vmul.f32 %v212, %v212
        %v237 = vsel %vm214, %v233, 0.0
        %v238 = vsel %vm214, %v234, 0.0
        %v239 = vadd.f32 %v237, %v238
        %v240 = vsel %vm214, %v235, 0.0
        %v241 = vadd.f32 %v239, %v240
        %v242 = vsel %vm220, %v236, 0.0
        %v243 = vadd.f32 %v241, %v242
        %v244 = vrot.slane %v243, 4
        %v245 = vadd.f32 %v243, %v244
        %v246 = vrot.slane %v245, 2
        %v247 = vadd.f32 %v245, %v246
        %v248 = vrot.slane %v247, 1
        %v249 = vadd.f32 %v247, %v248
        %v250 = vadd.f32 %v232, %v249
        %251 = vst.msk [vmem:[%s200] sm:$0x1] %vm230, %v250
        %s252 = sand.u32 %s82, 1
        %s253 = scalar_lea.sflag [#allocation4], %s252
        %s254 = sand.u32 %s82, 1
        %s255 = scalar_lea.vmem [#allocation5], %s254
        %s256 = sand.u32 %s110, 1
        %s257 = scalar_lea.sflag [#allocation7], %s256
        %s258 = sand.u32 %s110, 1
        %s259 = scalar_lea.vmem [#allocation6], %s258
        // Predicated region
        $region33: #{conv_feature_extraction_forward.6} parent=23 // pred_check
          %p260 = pneg %p92
        $region34: #{conv_feature_extraction_forward.6} parent=23 // pred_check_branch
          %262 = sbr.rel (%p260) target = $region36
        $region35: #{conv_feature_extraction_forward.6} parent=23 // pred_region
          %s264 = ssub.s32 16, 16
          %265 = vsyncadd %s253, %s264
          %s266 = sadd.s32 %s29, %s28
          %s267 = smul.addr %s266, 16
          %s268 = scalar_lea.hbm %s1, %s267
          %s270 = sshll.u32 %s255, 4
          %s271 = int_to_ptr.vmem [resolvable:$true] %s270
          %273 = dma.vmem_to_hbm [thread:$0]  %s271, 16, %s268, %s253
        $region36: #{conv_feature_extraction_forward.6} parent=23 // pred_fallthru
          _
        // Predicated region
        $region37: #{conv_feature_extraction_forward.6} parent=23 // pred_check
          %p274 = pneg %p120
        $region38: #{conv_feature_extraction_forward.6} parent=23 // pred_check_branch
          %276 = sbr.rel (%p274) target = $region40
        $region39: #{conv_feature_extraction_forward.6} parent=23 // pred_region
          %s278 = ssub.s32 16, 16
          %279 = vsyncadd %s257, %s278
          %s280 = sadd.s32 %s29, %s28
          %s281 = smul.addr %s280, 16
          %s282 = scalar_lea.hbm %s2, %s281
          %s284 = sshll.u32 %s259, 4
          %s285 = int_to_ptr.vmem [resolvable:$true] %s284
          %287 = dma.vmem_to_hbm [thread:$0]  %s285, 16, %s282, %s257
        $region40: #{conv_feature_extraction_forward.6} parent=23 // pred_fallthru
          _
      $region24: #{conv_feature_extraction_forward.6} parent=5 // pred_fallthru
        _
      %p288 = scmp.le.s32.totalorder 2, %s18
      // Predicated region
      $region41: #{conv_feature_extraction_forward.6} parent=5 // pred_check
        %p289 = pneg %p288
      $region42: #{conv_feature_extraction_forward.6} parent=5 // pred_check_branch
        %291 = sbr.rel (%p289) target = $region44
      $region43: #{conv_feature_extraction_forward.6} parent=5 // pred_region
        %s292 = ssub.s32 %s18, 2
        // Predicated region
        $region45: #{conv_feature_extraction_forward.6} parent=43 // pred_check
          %p293 = pneg %p98
        $region46: #{conv_feature_extraction_forward.6} parent=43 // pred_check_branch
          %295 = sbr.rel (%p293) target = $region48
        $region47: #{conv_feature_extraction_forward.6} parent=43 // pred_region
          %s296 = sand.u32 %s83, 1
          %s297 = scalar_lea.sflag [#allocation4], %s296
          %s298 = sand.u32 %s83, 1
          %s299 = scalar_lea.vmem [#allocation5], %s298
          %300 = dma.done %s297, 16
        $region48: #{conv_feature_extraction_forward.6} parent=43 // pred_fallthru
          _
        // Predicated region
        $region49: #{conv_feature_extraction_forward.6} parent=43 // pred_check
          %p301 = pneg %p126
        $region50: #{conv_feature_extraction_forward.6} parent=43 // pred_check_branch
          %303 = sbr.rel (%p301) target = $region52
        $region51: #{conv_feature_extraction_forward.6} parent=43 // pred_region
          %s304 = sand.u32 %s111, 1
          %s305 = scalar_lea.sflag [#allocation7], %s304
          %s306 = sand.u32 %s111, 1
          %s307 = scalar_lea.vmem [#allocation6], %s306
          %308 = dma.done %s305, 16
        $region52: #{conv_feature_extraction_forward.6} parent=43 // pred_fallthru
          _
      $region44: #{conv_feature_extraction_forward.6} parent=5 // pred_fallthru
        _
    $region6: #{conv_feature_extraction_forward.6} parent=1 // loop_footer
      %s22 = sadd.s32 1, %s18
    $region7: #{conv_feature_extraction_forward.6} parent=1 // loop_footer_branch
      %17 = sbr.rel target = $region3
    $region8: #{conv_feature_extraction_forward.6} parent=1 // loop_exit
      _
    %309 = vsyncpa [#allocation3], 1
    %s310 = scalar_lea.sflag [#allocation3], 1
    %311 = vsyncpa %s310, 1
    %312 = vsyncpa [#allocation4], 1
    %s313 = scalar_lea.sflag [#allocation4], 1
    %314 = vsyncpa %s313, 1
    %315 = vsyncpa [#allocation7], 1
    %s316 = scalar_lea.sflag [#allocation7], 1
    %317 = vsyncpa %s316, 1

// kernel: conv_feature_extraction_forward.7
$region0: #{conv_feature_extraction_forward.7}
  #allocation0 [shape = 'u32[]', space=smem, size = 0x4, offset = 0x4, fixed_abs, tag = 'smem constant byte address 0x4 - core index']
  #allocation1 [shape = 'u32[144,128]{1,0:T(1,128)}', space=vmem, size = 0x12000, scoped, tag = 'internal scratch']
  %s0 = inlined_call_operand.hbm [shape: f32[2,31,32], index: 0, kind: input, shape index: {}]
  %s1 = inlined_call_operand.hbm [shape: f32[2,1,32], index: 1, kind: input, shape index: {}]
  %s2 = inlined_call_operand.hbm [shape: f32[2,1,32], index: 2, kind: input, shape index: {}]
  %s3 = inlined_call_operand.hbm [shape: f32[2,31,32], index: 3, kind: output, shape index: {}]
  %s4 = sld [smem:[#allocation0]]
  $region57: #{conv_feature_extraction_forward.7} parent=0
    _
  %s6 = ssub.s32 1, %s4
  %s7 = scalar_select 0, %s6, %s4
  $region1: #{conv_feature_extraction_forward.7} parent=0
    #allocation2 [shape = 'u8[32768]{0}', space=vmem, size = 0x8000, scoped, tag = 'input window, operand 0']
    #allocation3 [shape = 's32[2]{0}', space=sflag, size = 0x8, scoped, tag = 'scoped memory for conv_feature_extraction_forward.7']
    #allocation4 [shape = 's32[2]{0}', space=sflag, size = 0x8, scoped, tag = 'scoped memory for conv_feature_extraction_forward.7']
    #allocation5 [shape = 'u8[1024]{0}', space=vmem, size = 0x400, scoped, tag = 'input window, operand 1']
    #allocation6 [shape = 's32[2]{0}', space=sflag, size = 0x8, scoped, tag = 'scoped memory for conv_feature_extraction_forward.7']
    #allocation7 [shape = 'u8[1024]{0}', space=vmem, size = 0x400, scoped, tag = 'input window, operand 2']
    #allocation8 [shape = 'u8[32768]{0}', space=vmem, size = 0x8000, scoped, tag = 'output window, operand 0']
    %8 = vsyncpa [#allocation3], 0
    %s9 = scalar_lea.sflag [#allocation3], 1
    %10 = vsyncpa %s9, 0
    %11 = vsyncpa [#allocation6], 0
    %s12 = scalar_lea.sflag [#allocation6], 1
    %13 = vsyncpa %s12, 0
    %14 = vsyncpa [#allocation4], 0
    %s15 = scalar_lea.sflag [#allocation4], 1
    %16 = vsyncpa %s15, 0
    loop: start=0, step=1, limit=4
    $region2: #{conv_feature_extraction_forward.7} parent=1 // loop_pre_header
      _
    $region3: #{conv_feature_extraction_forward.7} parent=1 // loop_header
      %s18 = sphi 0, %s22
      %p19 = scmp.ge.s32.totalorder %s18, 4
      %s25 = sphi 0, %s44
      %s26 = sphi 0, %s40
      %s27 = sphi 0, %s36
      %s28 = sphi 0, %s25
      %s29 = sphi 0, %s26
      %s30 = sphi 0, %s27
      %s31 = sphi 0, %s28
      %s32 = sphi 0, %s29
      %s33 = sphi 0, %s30
      %s51 = sphi 0, %s53
      %s54 = sphi 0, %s51
      %s55 = sphi 0, %s54
      %s71 = sphi 0, %s55
      %s79 = sphi 0, %s81
      %s82 = sphi 0, %s79
      %s83 = sphi 0, %s82
      %s99 = sphi 0, %s83
      %s107 = sphi 0, %s109
      %s110 = sphi 0, %s107
      %s111 = sphi 0, %s110
      %s127 = sphi 0, %s111
      %s137 = sphi 0, %s139
      %s140 = sphi 0, %s137
      %s141 = sphi 0, %s140
      %s157 = sphi 0, %s141
    $region4: #{conv_feature_extraction_forward.7} parent=1 // loop_header_branch
      %21 = sbr.rel (%p19) target = $region8
    $region5: #{conv_feature_extraction_forward.7} parent=1 // loop_body
      %s23 = ssub.s32 %s18, 1
      %s24 = ssub.s32 %s18, 2
      %s34 = sadd.s32 1, %s27
      %p35 = scmp.ge.s32.totalorder %s34, 1
      %s36 = scalar_select %p35, 0, %s34
      %s37 = sadd.s32 1, %s26
      %s38 = scalar_select %p35, %s37, %s26
      %p39 = scmp.ge.s32.totalorder %s38, 1
      %s40 = scalar_select %p39, 0, %s38
      %s41 = sadd.s32 1, %s25
      %s42 = scalar_select %p39, %s41, %s25
      %p43 = scmp.ge.s32.totalorder %s42, 2
      %s44 = scalar_select %p43, 0, %s42
      %s45 = ssub.s32 %s25, %s44
      %s46 = ssub.s32 %s26, %s40
      %s47 = sor.u32 %s45, %s46
      %s48 = ssub.s32 %s27, %s36
      %s49 = sor.u32 %s47, %s48
      %p50 = scmp.eq.s32.totalorder %s49, 0
      %s52 = sadd.s32 %s51, 1
      %s53 = scalar_select %p50, %s51, %s52
      %p56 = pneg %p50
      %p57 = scmp.eq.s32.totalorder %s18, 1
      %p58 = por %p56, %p57
      %p59 = scmp.ne.s32.totalorder %s51, %s54
      %p60 = scmp.eq.s32.totalorder %s18, 0
      %p61 = por %p59, %p60
      %p62 = scmp.ne.s32.totalorder %s51, %s54
      %p63 = scmp.eq.s32.totalorder %s23, 1
      %p64 = por %p62, %p63
      %p65 = scmp.ne.s32.totalorder %s54, %s55
      %p66 = scmp.eq.s32.totalorder %s23, 0
      %p67 = por %p65, %p66
      %p68 = scmp.ne.s32.totalorder %s54, %s55
      %p69 = scmp.eq.s32.totalorder %s24, 1
      %p70 = por %p68, %p69
      %p72 = scmp.ne.s32.totalorder %s55, %s71
      %p73 = scmp.eq.s32.totalorder %s24, 0
      %p74 = por %p72, %p73
      %s75 = ssub.s32 %s25, %s44
      %s76 = ssub.s32 %s27, %s36
      %s77 = sor.u32 %s75, %s76
      %p78 = scmp.eq.s32.totalorder %s77, 0
      %s80 = sadd.s32 %s79, 1
      %s81 = scalar_select %p78, %s79, %s80
      %p84 = pneg %p78
      %p85 = scmp.eq.s32.totalorder %s18, 1
      %p86 = por %p84, %p85
      %p87 = scmp.ne.s32.totalorder %s79, %s82
      %p88 = scmp.eq.s32.totalorder %s18, 0
      %p89 = por %p87, %p88
      %p90 = scmp.ne.s32.totalorder %s79, %s82
      %p91 = scmp.eq.s32.totalorder %s23, 1
      %p92 = por %p90, %p91
      %p93 = scmp.ne.s32.totalorder %s82, %s83
      %p94 = scmp.eq.s32.totalorder %s23, 0
      %p95 = por %p93, %p94
      %p96 = scmp.ne.s32.totalorder %s82, %s83
      %p97 = scmp.eq.s32.totalorder %s24, 1
      %p98 = por %p96, %p97
      %p100 = scmp.ne.s32.totalorder %s83, %s99
      %p101 = scmp.eq.s32.totalorder %s24, 0
      %p102 = por %p100, %p101
      %s103 = ssub.s32 %s25, %s44
      %s104 = ssub.s32 %s27, %s36
      %s105 = sor.u32 %s103, %s104
      %p106 = scmp.eq.s32.totalorder %s105, 0
      %s108 = sadd.s32 %s107, 1
      %s109 = scalar_select %p106, %s107, %s108
      %p112 = pneg %p106
      %p113 = scmp.eq.s32.totalorder %s18, 1
      %p114 = por %p112, %p113
      %p115 = scmp.ne.s32.totalorder %s107, %s110
      %p116 = scmp.eq.s32.totalorder %s18, 0
      %p117 = por %p115, %p116
      %p118 = scmp.ne.s32.totalorder %s107, %s110
      %p119 = scmp.eq.s32.totalorder %s23, 1
      %p120 = por %p118, %p119
      %p121 = scmp.ne.s32.totalorder %s110, %s111
      %p122 = scmp.eq.s32.totalorder %s23, 0
      %p123 = por %p121, %p122
      %p124 = scmp.ne.s32.totalorder %s110, %s111
      %p125 = scmp.eq.s32.totalorder %s24, 1
      %p126 = por %p124, %p125
      %p128 = scmp.ne.s32.totalorder %s111, %s127
      %p129 = scmp.eq.s32.totalorder %s24, 0
      %p130 = por %p128, %p129
      %s131 = ssub.s32 %s25, %s44
      %s132 = ssub.s32 %s26, %s40
      %s133 = sor.u32 %s131, %s132
      %s134 = ssub.s32 %s27, %s36
      %s135 = sor.u32 %s133, %s134
      %p136 = scmp.eq.s32.totalorder %s135, 0
      %s138 = sadd.s32 %s137, 1
      %s139 = scalar_select %p136, %s137, %s138
      %p142 = pneg %p136
      %p143 = scmp.eq.s32.totalorder %s18, 1
      %p144 = por %p142, %p143
      %p145 = scmp.ne.s32.totalorder %s137, %s140
      %p146 = scmp.eq.s32.totalorder %s18, 0
      %p147 = por %p145, %p146
      %p148 = scmp.ne.s32.totalorder %s137, %s140
      %p149 = scmp.eq.s32.totalorder %s23, 1
      %p150 = por %p148, %p149
      %p151 = scmp.ne.s32.totalorder %s140, %s141
      %p152 = scmp.eq.s32.totalorder %s23, 0
      %p153 = por %p151, %p152
      %p154 = scmp.ne.s32.totalorder %s140, %s141
      %p155 = scmp.eq.s32.totalorder %s24, 1
      %p156 = por %p154, %p155
      %p158 = scmp.ne.s32.totalorder %s141, %s157
      %p159 = scmp.eq.s32.totalorder %s24, 0
      %p160 = por %p158, %p159
      %p161 = scmp.le.s32.totalorder 1, %s18
      %p162 = scmp.lt.s32.totalorder %s18, 3
      %p163 = pnand %p161, %p162
      %p164 = pneg %p163
      // Predicated region
      $region9: #{conv_feature_extraction_forward.7} parent=5 // pred_check
        _
      $region10: #{conv_feature_extraction_forward.7} parent=5 // pred_check_branch
        %166 = sbr.rel (%p163) target = $region12
      $region11: #{conv_feature_extraction_forward.7} parent=5 // pred_region
        %s167 = ssub.s32 %s18, 1
      $region12: #{conv_feature_extraction_forward.7} parent=5 // pred_fallthru
        _
      %p168 = scmp.lt.s32.totalorder %s18, 2
      // Predicated region
      $region13: #{conv_feature_extraction_forward.7} parent=5 // pred_check
        %p169 = pneg %p168
      $region14: #{conv_feature_extraction_forward.7} parent=5 // pred_check_branch
        %171 = sbr.rel (%p169) target = $region16
      $region15: #{conv_feature_extraction_forward.7} parent=5 // pred_region
        // Predicated region
        $region17: #{conv_feature_extraction_forward.7} parent=15 // pred_check
          %p172 = pneg %p61
        $region18: #{conv_feature_extraction_forward.7} parent=15 // pred_check_branch
          %174 = sbr.rel (%p172) target = $region20
        $region19: #{conv_feature_extraction_forward.7} parent=15 // pred_region
          %s175 = sand.u32 %s51, 1
          %s176 = scalar_lea.sflag [#allocation3], %s175
          %s177 = sand.u32 %s51, 1
          %s178 = smul.addr %s177, 32
          %s179 = scalar_lea.vmem [#allocation2], %s178
          %s180 = smul.u32 4, %s26
          %s182 = ssub.s32 512, 512
          %183 = vsyncadd %s176, %s182
          %s184 = sadd.s32 %s27, %s180
          %s185 = smul.addr %s25, 4
          %s186 = sadd.s32 %s184, %s185
          %s187 = smul.addr %s186, 128
          %s188 = scalar_lea.hbm %s0, %s187
          %s189 = sshll.u32 %s179, 4
          %s190 = int_to_ptr.vmem [resolvable:$true] %s189
          %195 = dma.hbm_to_vmem [thread:$0]  %s188, 512, %s190, %s176, 128, 128, 8
        $region20: #{conv_feature_extraction_forward.7} parent=15 // pred_fallthru
          _
        // Predicated region
        $region21: #{conv_feature_extraction_forward.7} parent=15 // pred_check
          %p196 = pneg %p89
        $region22: #{conv_feature_extraction_forward.7} parent=15 // pred_check_branch
          %198 = sbr.rel (%p196) target = $region24
        $region23: #{conv_feature_extraction_forward.7} parent=15 // pred_region
          %s199 = sand.u32 %s18, 1
          %s200 = scalar_lea.sflag [#allocation6], %s199
          %s201 = sand.u32 %s79, 1
          %s202 = scalar_lea.vmem [#allocation5], %s201
          %s204 = ssub.s32 16, 16
          %205 = vsyncadd %s200, %s204
          %s206 = sadd.s32 %s27, %s25
          %s207 = smul.addr %s206, 16
          %s208 = scalar_lea.hbm %s1, %s207
          %s210 = sshll.u32 %s202, 4
          %s211 = int_to_ptr.vmem [resolvable:$true] %s210
          %213 = dma.hbm_to_vmem [thread:$0]  %s208, 16, %s211, %s200
        $region24: #{conv_feature_extraction_forward.7} parent=15 // pred_fallthru
          _
        // Predicated region
        $region25: #{conv_feature_extraction_forward.7} parent=15 // pred_check
          %p214 = pneg %p117
        $region26: #{conv_feature_extraction_forward.7} parent=15 // pred_check_branch
          %216 = sbr.rel (%p214) target = $region28
        $region27: #{conv_feature_extraction_forward.7} parent=15 // pred_region
          %s217 = sand.u32 %s18, 1
          %s218 = scalar_lea.sflag [#allocation6], %s217
          %s219 = sand.u32 %s107, 1
          %s220 = scalar_lea.vmem [#allocation7], %s219
          %s222 = ssub.s32 16, 16
          %223 = vsyncadd %s218, %s222
          %s224 = sadd.s32 %s27, %s25
          %s225 = smul.addr %s224, 16
          %s226 = scalar_lea.hbm %s2, %s225
          %s228 = sshll.u32 %s220, 4
          %s229 = int_to_ptr.vmem [resolvable:$true] %s228
          %231 = dma.hbm_to_vmem [thread:$0]  %s226, 16, %s229, %s218
        $region28: #{conv_feature_extraction_forward.7} parent=15 // pred_fallthru
          _
      $region16: #{conv_feature_extraction_forward.7} parent=5 // pred_fallthru
        _
      %p232 = scmp.le.s32.totalorder 1, %s18
      %p233 = scmp.lt.s32.totalorder %s18, 3
      %p234 = pnand %p232, %p233
      %p235 = pneg %p234
      // Predicated region
      $region29: #{conv_feature_extraction_forward.7} parent=5 // pred_check
        _
      $region30: #{conv_feature_extraction_forward.7} parent=5 // pred_check_branch
        %237 = sbr.rel (%p234) target = $region32
      $region31: #{conv_feature_extraction_forward.7} parent=5 // pred_region
        %s238 = ssub.s32 %s18, 1
        %s239 = sand.u32 %s54, 1
        %s240 = scalar_lea.sflag [#allocation3], %s239
        %s241 = sand.u32 %s54, 1
        %s242 = smul.addr %s241, 32
        %s243 = scalar_lea.vmem [#allocation2], %s242
        // Predicated region
        $region33: #{conv_feature_extraction_forward.7} parent=31 // pred_check
          %p244 = pneg %p67
        $region34: #{conv_feature_extraction_forward.7} parent=31 // pred_check_branch
          %246 = sbr.rel (%p244) target = $region36
        $region35: #{conv_feature_extraction_forward.7} parent=31 // pred_region
          %247 = dma.done %s240, 512
        $region36: #{conv_feature_extraction_forward.7} parent=31 // pred_fallthru
          _
        %s248 = sand.u32 %s23, 1
        %s249 = scalar_lea.sflag [#allocation6], %s248
        %s250 = sand.u32 %s82, 1
        %s251 = scalar_lea.vmem [#allocation5], %s250
        // Predicated region
        $region37: #{conv_feature_extraction_forward.7} parent=31 // pred_check
          %p252 = pneg %p95
        $region38: #{conv_feature_extraction_forward.7} parent=31 // pred_check_branch
          %254 = sbr.rel (%p252) target = $region40
        $region39: #{conv_feature_extraction_forward.7} parent=31 // pred_region
          %255 = dma.done %s249, 16
        $region40: #{conv_feature_extraction_forward.7} parent=31 // pred_fallthru
          _
        %s256 = sand.u32 %s23, 1
        %s257 = scalar_lea.sflag [#allocation6], %s256
        %s258 = sand.u32 %s110, 1
        %s259 = scalar_lea.vmem [#allocation7], %s258
        // Predicated region
        $region41: #{conv_feature_extraction_forward.7} parent=31 // pred_check
          %p260 = pneg %p123
        $region42: #{conv_feature_extraction_forward.7} parent=31 // pred_check_branch
          %262 = sbr.rel (%p260) target = $region44
        $region43: #{conv_feature_extraction_forward.7} parent=31 // pred_region
          %263 = dma.done %s257, 16
        $region44: #{conv_feature_extraction_forward.7} parent=31 // pred_fallthru
          _
        %s264 = sand.u32 %s54, 1
        %s265 = scalar_lea.sflag [#allocation3], %s264
        %s266 = sand.u32 %s54, 1
        %s267 = smul.addr %s266, 32
        %s268 = scalar_lea.vmem [#allocation2], %s267
        %p269 = pneg %p67
        %p270 = pneg %p64
        %s271 = sand.u32 %s23, 1
        %s272 = scalar_lea.sflag [#allocation6], %s271
        %s273 = sand.u32 %s82, 1
        %s274 = scalar_lea.vmem [#allocation5], %s273
        %p275 = pneg %p95
        %p276 = pneg %p92
        %s277 = sand.u32 %s23, 1
        %s278 = scalar_lea.sflag [#allocation6], %s277
        %s279 = sand.u32 %s110, 1
        %s280 = scalar_lea.vmem [#allocation7], %s279
        %p281 = pneg %p123
        %p282 = pneg %p120
        %p283 = pneg %p153
        %p284 = pneg %p150
        %s285 = sand.u32 %s140, 1
        %s286 = scalar_lea.sflag [#allocation4], %s285
        %s287 = sand.u32 %s140, 1
        %s288 = smul.addr %s287, 32
        %s289 = scalar_lea.vmem [#allocation8], %s288
        %s290 = smul.u32 4, %s29
        %s291 = smul.u32 4, %s29
        %v292 = vld [vmem:[%s243] sm:$0xff]
        %v293 = vld [vmem:[%s243 + $0x8] sm:$0xff]
        %v294 = vld [vmem:[%s243 + $0x10] sm:$0xff]
        %v295 = vld [vmem:[%s243 + $0x18] sm:$0x7f]
        %v296 = vld [vmem:[%s251] sm:$0x1]
        %v298 = vlaneseq
        %v299 = vshrl.u32 %v298, 7
        %v300 = vsub.s32 0, %v299
        %v301 = vrot.slane %v296, %v300
        %v303 = vmul.f32 %v292, %v301
        %v304 = vmul.f32 %v293, %v301
        %v305 = vmul.f32 %v294, %v301
        %v306 = vmul.f32 %v295, %v301
        %v307 = vld [vmem:[%s259] sm:$0x1]
        %v309 = vlaneseq
        %v310 = vshrl.u32 %v309, 7
        %v311 = vsub.s32 0, %v310
        %v312 = vrot.slane %v307, %v311
        %v314 = vadd.f32 %v303, %v312
        %v315 = vadd.f32 %v304, %v312
        %v316 = vadd.f32 %v305, %v312
        %v317 = vadd.f32 %v306, %v312
        %v318 = vmul.f32 %v314, 0.5
        %v319 = vmul.f32 %v315, 0.5
        %v320 = vmul.f32 %v316, 0.5
        %v321 = vmul.f32 %v317, 0.5
        %v322 = vmul.f32 %v314, 0.70710677
        %v323 = vmul.f32 %v315, 0.70710677
        %v324 = vmul.f32 %v316, 0.70710677
        %v325 = vmul.f32 %v317, 0.70710677
        %v326 = vand.u32 2147483647, %v322
        %v327 = vand.u32 2147483647, %v323
        %v328 = vand.u32 2147483647, %v324
        %v329 = vand.u32 2147483647, %v325
        %v330 = vmul.f32 %v326, 0.3275911
        %v331 = vmul.f32 %v327, 0.3275911
        %v332 = vmul.f32 %v328, 0.3275911
        %v333 = vmul.f32 %v329, 0.3275911
        %v334 = vadd.f32 %v330, 1.0
        %v335 = vadd.f32 %v331, 1.0
        %v336 = vadd.f32 %v332, 1.0
        %v337 = vadd.f32 %v333, 1.0
        %v338 = vrcp.pop %v334
        %v339 = vmul.f32 1.0, %v338
        %v340 = vrcp.pop %v335
        %v341 = vmul.f32 1.0, %v340
        %v342 = vrcp.pop %v336
        %v343 = vmul.f32 1.0, %v342
        %v344 = vrcp.pop %v337
        %v345 = vmul.f32 1.0, %v344
        %v346 = vmul.f32 %v339, 1.0614054
        %v347 = vmul.f32 %v341, 1.0614054
        %v348 = vmul.f32 %v343, 1.0614054
        %v349 = vmul.f32 %v345, 1.0614054
        %v350 = vadd.f32 %v346, -1.4531521
        %v351 = vadd.f32 %v347, -1.4531521
        %v352 = vadd.f32 %v348, -1.4531521
        %v353 = vadd.f32 %v349, -1.4531521
        %v354 = vmul.f32 %v339, %v350
        %v355 = vmul.f32 %v341, %v351
        %v356 = vmul.f32 %v343, %v352
        %v357 = vmul.f32 %v345, %v353
        %v358 = vadd.f32 %v354, 1.4214138
        %v359 = vadd.f32 %v355, 1.4214138
        %v360 = vadd.f32 %v356, 1.4214138
        %v361 = vadd.f32 %v357, 1.4214138
        %v362 = vmul.f32 %v339, %v358
        %v363 = vmul.f32 %v341, %v359
        %v364 = vmul.f32 %v343, %v360
        %v365 = vmul.f32 %v345, %v361
        %v366 = vadd.f32 %v362, -0.28449672
        %v367 = vadd.f32 %v363, -0.28449672
        %v368 = vadd.f32 %v364, -0.28449672
        %v369 = vadd.f32 %v365, -0.28449672
        %v370 = vmul.f32 %v339, %v366
        %v371 = vmul.f32 %v341, %v367
        %v372 = vmul.f32 %v343, %v368
        %v373 = vmul.f32 %v345, %v369
        %v374 = vadd.f32 %v370, 0.2548296
        %v375 = vadd.f32 %v371, 0.2548296
        %v376 = vadd.f32 %v372, 0.2548296
        %v377 = vadd.f32 %v373, 0.2548296
        %v378 = vmul.f32 %v339, %v374
        %v379 = vmul.f32 %v341, %v375
        %v380 = vmul.f32 %v343, %v376
        %v381 = vmul.f32 %v345, %v377
        %v382 = vsub.f32 0.0, %v326
        %v383 = vsub.f32 0.0, %v327
        %v384 = vsub.f32 0.0, %v328
        %v385 = vsub.f32 0.0, %v329
        %v386 = vmul.f32 %v382, %v326
        %v387 = vmul.f32 %v383, %v327
        %v388 = vmul.f32 %v384, %v328
        %v389 = vmul.f32 %v385, %v329
        %v390 = vmul.f32 %v386, 1.442695
        %v391 = vpow.pop %v390
        %v392 = vmul.f32 %v387, 1.442695
        %v393 = vpow.pop %v392
        %v394 = vmul.f32 %v388, 1.442695
        %v395 = vpow.pop %v394
        %v396 = vmul.f32 %v389, 1.442695
        %v397 = vpow.pop %v396
        %v398 = vmul.f32 %v378, %v391
        %v399 = vmul.f32 %v379, %v393
        %v400 = vmul.f32 %v380, %v395
        %v401 = vmul.f32 %v381, %v397
        %v402 = vsub.f32 1.0, %v398
        %v403 = vsub.f32 1.0, %v399
        %v404 = vsub.f32 1.0, %v400
        %v405 = vsub.f32 1.0, %v401
        %vm406 = vcmp.ge.f32.partialorder %v322, 0.0
        %vm407 = vcmp.ge.f32.partialorder %v323, 0.0
        %vm408 = vcmp.ge.f32.partialorder %v324, 0.0
        %vm409 = vcmp.ge.f32.partialorder %v325, 0.0
        %v410 = vsub.f32 0.0, %v402
        %v411 = vsub.f32 0.0, %v403
        %v412 = vsub.f32 0.0, %v404
        %v413 = vsub.f32 0.0, %v405
        %v414 = vsel %vm406, %v402, %v410
        %v415 = vsel %vm407, %v403, %v411
        %v416 = vsel %vm408, %v404, %v412
        %v417 = vsel %vm409, %v405, %v413
        %v418 = vadd.f32 %v414, 1.0
        %v419 = vadd.f32 %v415, 1.0
        %v420 = vadd.f32 %v416, 1.0
        %v421 = vadd.f32 %v417, 1.0
        %v422 = vmul.f32 %v318, %v418
        %v423 = vmul.f32 %v319, %v419
        %v424 = vmul.f32 %v320, %v420
        %v425 = vmul.f32 %v321, %v421
        %vm426 = vcmask 261120
        %427 = vst.msk [vmem:[%s289] sm:$0xff] %vm426, %v422
        %428 = vst.msk [vmem:[%s289 + $0x8] sm:$0xff] %vm426, %v423
        %429 = vst.msk [vmem:[%s289 + $0x10] sm:$0xff] %vm426, %v424
        %vm430 = vcmask 260096
        %431 = vst.msk [vmem:[%s289 + $0x18] sm:$0x7f] %vm430, %v425
        %s432 = sand.u32 %s140, 1
        %s433 = scalar_lea.sflag [#allocation4], %s432
        %s434 = sand.u32 %s140, 1
        %s435 = smul.addr %s434, 32
        %s436 = scalar_lea.vmem [#allocation8], %s435
        // Predicated region
        $region45: #{conv_feature_extraction_forward.7} parent=31 // pred_check
          %p437 = pneg %p150
        $region46: #{conv_feature_extraction_forward.7} parent=31 // pred_check_branch
          %439 = sbr.rel (%p437) target = $region48
        $region47: #{conv_feature_extraction_forward.7} parent=31 // pred_region
          %s440 = smul.u32 4, %s29
          %s442 = ssub.s32 512, 512
          %443 = vsyncadd %s433, %s442
          %s444 = sadd.s32 %s30, %s440
          %s445 = smul.addr %s28, 4
          %s446 = sadd.s32 %s444, %s445
          %s447 = smul.addr %s446, 128
          %s448 = scalar_lea.hbm %s3, %s447
          %s449 = sshll.u32 %s436, 4
          %s450 = int_to_ptr.vmem [resolvable:$true] %s449
          %455 = dma.vmem_to_hbm [thread:$0]  %s450, 512, %s448, %s433, 128, 128, 8
        $region48: #{conv_feature_extraction_forward.7} parent=31 // pred_fallthru
          _
      $region32: #{conv_feature_extraction_forward.7} parent=5 // pred_fallthru
        _
      %p456 = scmp.le.s32.totalorder 2, %s18
      // Predicated region
      $region49: #{conv_feature_extraction_forward.7} parent=5 // pred_check
        %p457 = pneg %p456
      $region50: #{conv_feature_extraction_forward.7} parent=5 // pred_check_branch
        %459 = sbr.rel (%p457) target = $region52
      $region51: #{conv_feature_extraction_forward.7} parent=5 // pred_region
        %s460 = ssub.s32 %s18, 2
        // Predicated region
        $region53: #{conv_feature_extraction_forward.7} parent=51 // pred_check
          %p461 = pneg %p156
        $region54: #{conv_feature_extraction_forward.7} parent=51 // pred_check_branch
          %463 = sbr.rel (%p461) target = $region56
        $region55: #{conv_feature_extraction_forward.7} parent=51 // pred_region
          %s464 = sand.u32 %s141, 1
          %s465 = scalar_lea.sflag [#allocation4], %s464
          %s466 = sand.u32 %s141, 1
          %s467 = smul.addr %s466, 32
          %s468 = scalar_lea.vmem [#allocation8], %s467
          %469 = dma.done %s465, 512
        $region56: #{conv_feature_extraction_forward.7} parent=51 // pred_fallthru
          _
      $region52: #{conv_feature_extraction_forward.7} parent=5 // pred_fallthru
        _
    $region6: #{conv_feature_extraction_forward.7} parent=1 // loop_footer
      %s22 = sadd.s32 1, %s18
    $region7: #{conv_feature_extraction_forward.7} parent=1 // loop_footer_branch
      %17 = sbr.rel target = $region3
    $region8: #{conv_feature_extraction_forward.7} parent=1 // loop_exit
      _
    %470 = vsyncpa [#allocation3], 1
    %s471 = scalar_lea.sflag [#allocation3], 1
    %472 = vsyncpa %s471, 1
    %473 = vsyncpa [#allocation6], 1
    %s474 = scalar_lea.sflag [#allocation6], 1
    %475 = vsyncpa %s474, 1
    %476 = vsyncpa [#allocation4], 1
    %s477 = scalar_lea.sflag [#allocation4], 1
    %478 = vsyncpa %s477, 1

// kernel: conv_feature_extraction_forward.5
$region0: #{conv_feature_extraction_forward.5}
  #allocation0 [shape = 'u32[]', space=smem, size = 0x4, offset = 0x4, fixed_abs, tag = 'smem constant byte address 0x4 - core index']
  #allocation1 [shape = 'u32[144,128]{1,0:T(1,128)}', space=vmem, size = 0x12000, scoped, tag = 'internal scratch']
  %s0 = inlined_call_operand.hbm [shape: f32[62,10], index: 0, kind: input, shape index: {}]
  %s1 = inlined_call_operand.hbm [shape: f32[10,32], index: 1, kind: input, shape index: {}]
  %s2 = inlined_call_operand.hbm [shape: f32[62,32], index: 2, kind: output, shape index: {}]
  %s3 = sld [smem:[#allocation0]]
  $region49: #{conv_feature_extraction_forward.5} parent=0
    _
  %s5 = ssub.s32 1, %s3
  %s6 = scalar_select 0, %s5, %s3
  $region1: #{conv_feature_extraction_forward.5} parent=0
    #allocation2 [shape = 'u8[32768]{0}', space=vmem, size = 0x8000, scoped, tag = 'input window, operand 0']
    #allocation3 [shape = 's32[2]{0}', space=sflag, size = 0x8, scoped, tag = 'scoped memory for conv_feature_extraction_forward.5']
    #allocation4 [shape = 's32[2]{0}', space=sflag, size = 0x8, scoped, tag = 'scoped memory for conv_feature_extraction_forward.5']
    #allocation5 [shape = 'u8[8192]{0}', space=vmem, size = 0x2000, scoped, tag = 'input window, operand 1, single buffered']
    #allocation6 [shape = 's32[1]{0}', space=sflag, size = 0x4, scoped, tag = 'scoped memory for conv_feature_extraction_forward.5']
    #allocation7 [shape = 'u8[32768]{0}', space=vmem, size = 0x8000, scoped, tag = 'output window, operand 0']
    %7 = vsyncpa [#allocation3], 0
    %s8 = scalar_lea.sflag [#allocation3], 1
    %9 = vsyncpa %s8, 0
    %10 = vsyncpa [#allocation6], 0
    %11 = vsyncpa [#allocation4], 0
    %s12 = scalar_lea.sflag [#allocation4], 1
    %13 = vsyncpa %s12, 0
    loop: start=0, step=1, limit=4
    $region2: #{conv_feature_extraction_forward.5} parent=1 // loop_pre_header
      _
    $region3: #{conv_feature_extraction_forward.5} parent=1 // loop_header
      %s15 = sphi 0, %s19
      %p16 = scmp.ge.s32.totalorder %s15, 4
      %s25 = sphi 0, %s27
      %s28 = sphi 0, %s25
      %s29 = sphi 0, %s28
      %s45 = sphi 0, %s29
      %s49 = sphi 0, %s49
      %s51 = sphi 0, %s49
      %s52 = sphi 0, %s51
      %s66 = sphi 0, %s52
      %s72 = sphi 0, %s74
      %s75 = sphi 0, %s72
      %s76 = sphi 0, %s75
      %s92 = sphi 0, %s76
    $region4: #{conv_feature_extraction_forward.5} parent=1 // loop_header_branch
      %18 = sbr.rel (%p16) target = $region8
    $region5: #{conv_feature_extraction_forward.5} parent=1 // loop_body
      %s20 = ssub.s32 %s15, 1
      %s21 = ssub.s32 %s15, 2
      %s22 = sadd.s32 %s15, 1
      %s23 = ssub.s32 %s15, %s22
      %p24 = scmp.eq.s32.totalorder %s23, 0
      %s26 = sadd.s32 %s25, 1
      %s27 = scalar_select %p24, %s25, %s26
      %p30 = pneg %p24
      %p31 = scmp.eq.s32.totalorder %s15, 1
      %p32 = por %p30, %p31
      %p33 = scmp.ne.s32.totalorder %s25, %s28
      %p34 = scmp.eq.s32.totalorder %s15, 0
      %p35 = por %p33, %p34
      %p36 = scmp.ne.s32.totalorder %s25, %s28
      %p37 = scmp.eq.s32.totalorder %s20, 1
      %p38 = por %p36, %p37
      %p39 = scmp.ne.s32.totalorder %s28, %s29
      %p40 = scmp.eq.s32.totalorder %s20, 0
      %p41 = por %p39, %p40
      %p42 = scmp.ne.s32.totalorder %s28, %s29
      %p43 = scmp.eq.s32.totalorder %s21, 1
      %p44 = por %p42, %p43
      %p46 = scmp.ne.s32.totalorder %s29, %s45
      %p47 = scmp.eq.s32.totalorder %s21, 0
      %p48 = por %p46, %p47
      %s50 = sadd.s32 %s49, 1
      %p53 = scmp.eq.s32.totalorder %s15, 1
      %p54 = scmp.ne.s32.totalorder %s49, %s51
      %p55 = scmp.eq.s32.totalorder %s15, 0
      %p56 = por %p54, %p55
      %p57 = scmp.ne.s32.totalorder %s49, %s51
      %p58 = scmp.eq.s32.totalorder %s20, 1
      %p59 = por %p57, %p58
      %p60 = scmp.ne.s32.totalorder %s51, %s52
      %p61 = scmp.eq.s32.totalorder %s20, 0
      %p62 = por %p60, %p61
      %p63 = scmp.ne.s32.totalorder %s51, %s52
      %p64 = scmp.eq.s32.totalorder %s21, 1
      %p65 = por %p63, %p64
      %p67 = scmp.ne.s32.totalorder %s52, %s66
      %p68 = scmp.eq.s32.totalorder %s21, 0
      %p69 = por %p67, %p68
      %s70 = ssub.s32 %s15, %s22
      %p71 = scmp.eq.s32.totalorder %s70, 0
      %s73 = sadd.s32 %s72, 1
      %s74 = scalar_select %p71, %s72, %s73
      %p77 = pneg %p71
      %p78 = scmp.eq.s32.totalorder %s15, 1
      %p79 = por %p77, %p78
      %p80 = scmp.ne.s32.totalorder %s72, %s75
      %p81 = scmp.eq.s32.totalorder %s15, 0
      %p82 = por %p80, %p81
      %p83 = scmp.ne.s32.totalorder %s72, %s75
      %p84 = scmp.eq.s32.totalorder %s20, 1
      %p85 = por %p83, %p84
      %p86 = scmp.ne.s32.totalorder %s75, %s76
      %p87 = scmp.eq.s32.totalorder %s20, 0
      %p88 = por %p86, %p87
      %p89 = scmp.ne.s32.totalorder %s75, %s76
      %p90 = scmp.eq.s32.totalorder %s21, 1
      %p91 = por %p89, %p90
      %p93 = scmp.ne.s32.totalorder %s76, %s92
      %p94 = scmp.eq.s32.totalorder %s21, 0
      %p95 = por %p93, %p94
      %p96 = scmp.le.s32.totalorder 1, %s15
      %p97 = scmp.lt.s32.totalorder %s15, 3
      %p98 = pnand %p96, %p97
      %p99 = pneg %p98
      // Predicated region
      $region9: #{conv_feature_extraction_forward.5} parent=5 // pred_check
        _
      $region10: #{conv_feature_extraction_forward.5} parent=5 // pred_check_branch
        %101 = sbr.rel (%p98) target = $region12
      $region11: #{conv_feature_extraction_forward.5} parent=5 // pred_region
        %s102 = ssub.s32 %s15, 1
        // Predicated region
        $region13: #{conv_feature_extraction_forward.5} parent=11 // pred_check
          %p103 = pneg %p62
        $region14: #{conv_feature_extraction_forward.5} parent=11 // pred_check_branch
          %105 = sbr.rel (%p103) target = $region16
        $region15: #{conv_feature_extraction_forward.5} parent=11 // pred_region
          %s107 = ssub.s32 256, 256
          %108 = vsyncadd [#allocation6], %s107
          %s109 = sshll.u32 [#allocation5], 4
          %s110 = int_to_ptr.vmem [resolvable:$true] %s109
          %115 = dma.hbm_to_vmem [thread:$0]  %s1, 256, %s110, [#allocation6], 128, 128, 8
        $region16: #{conv_feature_extraction_forward.5} parent=11 // pred_fallthru
          _
      $region12: #{conv_feature_extraction_forward.5} parent=5 // pred_fallthru
        _
      %p116 = scmp.lt.s32.totalorder %s15, 2
      // Predicated region
      $region17: #{conv_feature_extraction_forward.5} parent=5 // pred_check
        %p117 = pneg %p116
      $region18: #{conv_feature_extraction_forward.5} parent=5 // pred_check_branch
        %119 = sbr.rel (%p117) target = $region20
      $region19: #{conv_feature_extraction_forward.5} parent=5 // pred_region
        // Predicated region
        $region21: #{conv_feature_extraction_forward.5} parent=19 // pred_check
          %p120 = pneg %p35
        $region22: #{conv_feature_extraction_forward.5} parent=19 // pred_check_branch
          %122 = sbr.rel (%p120) target = $region24
        $region23: #{conv_feature_extraction_forward.5} parent=19 // pred_region
          %s123 = sand.u32 %s25, 1
          %s124 = scalar_lea.sflag [#allocation3], %s123
          %s125 = sand.u32 %s25, 1
          %s126 = smul.addr %s125, 32
          %s127 = scalar_lea.vmem [#allocation2], %s126
          %s128 = smul.u32 4, %s15
          %s130 = ssub.s32 512, 512
          %131 = vsyncadd %s124, %s130
          %s132 = smul.addr %s128, 128
          %s133 = scalar_lea.hbm %s0, %s132
          %s134 = sshll.u32 %s127, 4
          %s135 = int_to_ptr.vmem [resolvable:$true] %s134
          %140 = dma.hbm_to_vmem [thread:$0]  %s133, 512, %s135, %s124, 128, 128, 8
        $region24: #{conv_feature_extraction_forward.5} parent=19 // pred_fallthru
          _
      $region20: #{conv_feature_extraction_forward.5} parent=5 // pred_fallthru
        _
      %p141 = scmp.le.s32.totalorder 1, %s15
      %p142 = scmp.lt.s32.totalorder %s15, 3
      %p143 = pnand %p141, %p142
      %p144 = pneg %p143
      // Predicated region
      $region25: #{conv_feature_extraction_forward.5} parent=5 // pred_check
        _
      $region26: #{conv_feature_extraction_forward.5} parent=5 // pred_check_branch
        %146 = sbr.rel (%p143) target = $region28
      $region27: #{conv_feature_extraction_forward.5} parent=5 // pred_region
        %s147 = ssub.s32 %s15, 1
        %s148 = sand.u32 %s28, 1
        %s149 = scalar_lea.sflag [#allocation3], %s148
        %s150 = sand.u32 %s28, 1
        %s151 = smul.addr %s150, 32
        %s152 = scalar_lea.vmem [#allocation2], %s151
        // Predicated region
        $region29: #{conv_feature_extraction_forward.5} parent=27 // pred_check
          %p153 = pneg %p41
        $region30: #{conv_feature_extraction_forward.5} parent=27 // pred_check_branch
          %155 = sbr.rel (%p153) target = $region32
        $region31: #{conv_feature_extraction_forward.5} parent=27 // pred_region
          %156 = dma.done %s149, 512
        $region32: #{conv_feature_extraction_forward.5} parent=27 // pred_fallthru
          _
        // Predicated region
        $region33: #{conv_feature_extraction_forward.5} parent=27 // pred_check
          %p157 = pneg %p62
        $region34: #{conv_feature_extraction_forward.5} parent=27 // pred_check_branch
          %159 = sbr.rel (%p157) target = $region36
        $region35: #{conv_feature_extraction_forward.5} parent=27 // pred_region
          %160 = dma.done [#allocation6], 256
        $region36: #{conv_feature_extraction_forward.5} parent=27 // pred_fallthru
          _
        %s161 = sand.u32 %s28, 1
        %s162 = scalar_lea.sflag [#allocation3], %s161
        %s163 = sand.u32 %s28, 1
        %s164 = smul.addr %s163, 32
        %s165 = scalar_lea.vmem [#allocation2], %s164
        %p166 = pneg %p41
        %p167 = pneg %p38
        %p168 = pneg %p62
        %p169 = pneg %p59
        %p170 = pneg %p88
        %p171 = pneg %p85
        %s172 = sand.u32 %s75, 1
        %s173 = scalar_lea.sflag [#allocation4], %s172
        %s174 = sand.u32 %s75, 1
        %s175 = smul.addr %s174, 32
        %s176 = scalar_lea.vmem [#allocation7], %s175
        %s177 = smul.u32 4, %s20
        %s178 = smul.u32 4, %s20
        %v179 = vld [vmem:[%s152] sm:$0xff]
        %v180 = vld [vmem:[%s152 + $0x8] sm:$0xff]
        %v181 = vld [vmem:[%s152 + $0x10] sm:$0xff]
        %v182 = vld [vmem:[%s152 + $0x18] sm:$0xff]
        %v183 = vld [vmem:[#allocation5] sm:$0xff]
        %v184 = vld [vmem:[#allocation5 + $0x8] sm:$0x3]
        %vm185 = vcmask 80896
        %v187 = vsel %vm185, %v179, 0
        %v190 = vsel %vm185, %v180, 0
        %v193 = vsel %vm185, %v181, 0
        %v196 = vsel %vm185, %v182, 0
        %vm198 = vcmask 1041408
        %v200 = vsel %vm198, %v184, 0
        %202 = vmatprep.subr.mxu0 0.0
        %203 = vmatpush1.msra.mxu0 %v183
        %204 = vmatprep.subr.mxu0 0.0
        %205 = vmatpush1.msra.mxu0 %v200
        %206 = vmatprep.subr.mxu0 0.0
        %207 = vmatpush1.msra.mxu0 0.0
        %208 = vmatprep.subr.mxu0 0.0
        %209 = vmatpush1.msra.mxu0 0.0
        %210 = vmatprep.subr.mxu0 0.0
        %211 = vmatpush1.msra.mxu0 0.0
        %212 = vmatprep.subr.mxu0 0.0
        %213 = vmatpush1.msra.mxu0 0.0
        %214 = vmatprep.subr.mxu0 0.0
        %215 = vmatpush1.msra.mxu0 0.0
        %216 = vmatprep.subr.mxu0 0.0
        %217 = vmatpush1.msra.mxu0 0.0
        %218 = vmatprep.subr.mxu0 0.0
        %219 = vmatpush1.msra.mxu0 0.0
        %220 = vmatprep.subr.mxu0 0.0
        %221 = vmatpush1.msra.mxu0 0.0
        %222 = vmatprep.subr.mxu0 0.0
        %223 = vmatpush1.msra.mxu0 0.0
        %224 = vmatprep.subr.mxu0 0.0
        %225 = vmatpush1.msra.mxu0 0.0
        %226 = vmatprep.subr.mxu0 0.0
        %227 = vmatpush1.msra.mxu0 0.0
        %228 = vmatprep.subr.mxu0 0.0
        %229 = vmatpush1.msra.mxu0 0.0
        %230 = vmatprep.subr.mxu0 0.0
        %231 = vmatpush1.msra.mxu0 0.0
        %232 = vmatprep.subr.mxu0 0.0
        %233 = vmatpush1.msra.mxu0 0.0
        %234 = vmatprep.subr.mxu0 0.0
        %235 = vmatpush1.msra.mxu0 0.0
        %236 = vmatprep.subr.mxu0 0.0
        %237 = vmatpush1.msra.mxu0 0.0
        %238 = vmatprep.subr.mxu0 0.0
        %239 = vmatpush1.msra.mxu0 0.0
        %240 = vmatprep.subr.mxu0 0.0
        %241 = vmatpush1.msra.mxu0 0.0
        %242 = vmatprep.subr.mxu0 0.0
        %243 = vmatpush1.msra.mxu0 0.0
        %244 = vmatprep.subr.mxu0 0.0
        %245 = vmatpush1.msra.mxu0 0.0
        %246 = vmatprep.subr.mxu0 0.0
        %247 = vmatpush1.msra.mxu0 0.0
        %248 = vmatprep.subr.mxu0 0.0
        %249 = vmatpush1.msra.mxu0 0.0
        %250 = vmatprep.subr.mxu0 0.0
        %251 = vmatpush1.msra.mxu0 0.0
        %252 = vmatprep.subr.mxu0 0.0
        %253 = vmatpush1.msra.mxu0 0.0
        %254 = vmatprep.subr.mxu0 0.0
        %255 = vmatpush1.msra.mxu0 0.0
        %256 = vmatprep.subr.mxu0 0.0
        %257 = vmatpush1.msra.mxu0 0.0
        %258 = vmatprep.subr.mxu0 0.0
        %259 = vmatpush1.msra.mxu0 0.0
        %260 = vmatprep.subr.mxu0 0.0
        %261 = vmatpush1.msra.mxu0 0.0
        %262 = vmatprep.subr.mxu0 0.0
        %263 = vmatpush1.msra.mxu0 0.0
        %264 = vmatprep.subr.mxu0 0.0
        %265 = vmatpush1.msra.mxu0 0.0
        %266 = vmatprep.mubr.f32.mxu0 0.0
        %267 = vmatmul.mubr.f32.gmra.mrb[0].mxu0 %v187
        %v268 = vpop.f32.mrb[0].mxu0
        %v269 = vadd.f32 0.0, %v268
        %v270 = vpop.f32.mrb[0].mxu0
        %271 = vmatprep.mubr.f32.mxu0 0.0
        %272 = vmatmul.mubr.f32.gmra.mrb[0].mxu0 %v190
        %v273 = vpop.f32.mrb[0].mxu0
        %v274 = vadd.f32 0.0, %v273
        %v275 = vpop.f32.mrb[0].mxu0
        %276 = vmatprep.mubr.f32.mxu0 0.0
        %277 = vmatmul.mubr.f32.gmra.mrb[0].mxu0 %v193
        %v278 = vpop.f32.mrb[0].mxu0
        %v279 = vadd.f32 0.0, %v278
        %v280 = vpop.f32.mrb[0].mxu0
        %281 = vmatprep.mubr.f32.mxu0 0.0
        %282 = vmatmul.mubr.f32.gmra.mrb[0].mxu0 %v196
        %v283 = vpop.f32.mrb[0].mxu0
        %v284 = vadd.f32 0.0, %v283
        %v285 = vpop.f32.mrb[0].mxu0
        %286 = vdwg.mxu0
        %vm287 = vcmask 261120
        %288 = vst.msk [vmem:[%s176] sm:$0xff] %vm287, %v269
        %289 = vst.msk [vmem:[%s176 + $0x8] sm:$0xff] %vm287, %v274
        %290 = vst.msk [vmem:[%s176 + $0x10] sm:$0xff] %vm287, %v279
        %291 = vst.msk [vmem:[%s176 + $0x18] sm:$0xff] %vm287, %v284
        %s292 = sand.u32 %s75, 1
        %s293 = scalar_lea.sflag [#allocation4], %s292
        %s294 = sand.u32 %s75, 1
        %s295 = smul.addr %s294, 32
        %s296 = scalar_lea.vmem [#allocation7], %s295
        // Predicated region
        $region37: #{conv_feature_extraction_forward.5} parent=27 // pred_check
          %p297 = pneg %p85
        $region38: #{conv_feature_extraction_forward.5} parent=27 // pred_check_branch
          %299 = sbr.rel (%p297) target = $region40
        $region39: #{conv_feature_extraction_forward.5} parent=27 // pred_region
          %s300 = smul.u32 4, %s20
          %s302 = ssub.s32 512, 512
          %303 = vsyncadd %s293, %s302
          %s304 = smul.addr %s300, 128
          %s305 = scalar_lea.hbm %s2, %s304
          %s306 = sshll.u32 %s296, 4
          %s307 = int_to_ptr.vmem [resolvable:$true] %s306
          %312 = dma.vmem_to_hbm [thread:$0]  %s307, 512, %s305, %s293, 128, 128, 8
        $region40: #{conv_feature_extraction_forward.5} parent=27 // pred_fallthru
          _
      $region28: #{conv_feature_extraction_forward.5} parent=5 // pred_fallthru
        _
      %p313 = scmp.le.s32.totalorder 2, %s15
      // Predicated region
      $region41: #{conv_feature_extraction_forward.5} parent=5 // pred_check
        %p314 = pneg %p313
      $region42: #{conv_feature_extraction_forward.5} parent=5 // pred_check_branch
        %316 = sbr.rel (%p314) target = $region44
      $region43: #{conv_feature_extraction_forward.5} parent=5 // pred_region
        %s317 = ssub.s32 %s15, 2
        // Predicated region
        $region45: #{conv_feature_extraction_forward.5} parent=43 // pred_check
          %p318 = pneg %p91
        $region46: #{conv_feature_extraction_forward.5} parent=43 // pred_check_branch
          %320 = sbr.rel (%p318) target = $region48
        $region47: #{conv_feature_extraction_forward.5} parent=43 // pred_region
          %s321 = sand.u32 %s76, 1
          %s322 = scalar_lea.sflag [#allocation4], %s321
          %s323 = sand.u32 %s76, 1
          %s324 = smul.addr %s323, 32
          %s325 = scalar_lea.vmem [#allocation7], %s324
          %326 = dma.done %s322, 512
        $region48: #{conv_feature_extraction_forward.5} parent=43 // pred_fallthru
          _
      $region44: #{conv_feature_extraction_forward.5} parent=5 // pred_fallthru
        _
    $region6: #{conv_feature_extraction_forward.5} parent=1 // loop_footer
      %s19 = sadd.s32 1, %s15
    $region7: #{conv_feature_extraction_forward.5} parent=1 // loop_footer_branch
      %14 = sbr.rel target = $region3
    $region8: #{conv_feature_extraction_forward.5} parent=1 // loop_exit
      _
    %327 = vsyncpa [#allocation3], 1
    %s328 = scalar_lea.sflag [#allocation3], 1
    %329 = vsyncpa %s328, 1
    %330 = vsyncpa [#allocation6], 1
    %331 = vsyncpa [#allocation4], 1
    %s332 = scalar_lea.sflag [#allocation4], 1
    %333 = vsyncpa %s332, 1

// kernel: conv_feature_extraction_forward.8
$region0: #{conv_feature_extraction_forward.8}
  #allocation0 [shape = 'u32[]', space=smem, size = 0x4, offset = 0x4, fixed_abs, tag = 'smem constant byte address 0x4 - core index']
  #allocation1 [shape = 'u32[144,128]{1,0:T(1,128)}', space=vmem, size = 0x12000, scoped, tag = 'internal scratch']
  %s0 = inlined_call_operand.hbm [shape: f32[30,96], index: 0, kind: input, shape index: {}]
  %s1 = inlined_call_operand.hbm [shape: f32[96,32], index: 1, kind: input, shape index: {}]
  %s2 = inlined_call_operand.hbm [shape: f32[30,32], index: 2, kind: output, shape index: {}]
  %s3 = sld [smem:[#allocation0]]
  $region49: #{conv_feature_extraction_forward.8} parent=0
    _
  %s5 = ssub.s32 1, %s3
  %s6 = scalar_select 0, %s5, %s3
  $region1: #{conv_feature_extraction_forward.8} parent=0
    #allocation2 [shape = 'u8[16384]{0}', space=vmem, size = 0x4000, scoped, tag = 'input window, operand 0']
    #allocation3 [shape = 's32[2]{0}', space=sflag, size = 0x8, scoped, tag = 'scoped memory for conv_feature_extraction_forward.8']
    #allocation4 [shape = 's32[2]{0}', space=sflag, size = 0x8, scoped, tag = 'scoped memory for conv_feature_extraction_forward.8']
    #allocation5 [shape = 'u8[49152]{0}', space=vmem, size = 0xc000, scoped, tag = 'input window, operand 1, single buffered']
    #allocation6 [shape = 's32[1]{0}', space=sflag, size = 0x4, scoped, tag = 'scoped memory for conv_feature_extraction_forward.8']
    #allocation7 [shape = 'u8[16384]{0}', space=vmem, size = 0x4000, scoped, tag = 'output window, operand 0']
    %7 = vsyncpa [#allocation3], 0
    %s8 = scalar_lea.sflag [#allocation3], 1
    %9 = vsyncpa %s8, 0
    %10 = vsyncpa [#allocation6], 0
    %11 = vsyncpa [#allocation4], 0
    %s12 = scalar_lea.sflag [#allocation4], 1
    %13 = vsyncpa %s12, 0
    loop: start=0, step=1, limit=4
    $region2: #{conv_feature_extraction_forward.8} parent=1 // loop_pre_header
      _
    $region3: #{conv_feature_extraction_forward.8} parent=1 // loop_header
      %s15 = sphi 0, %s19
      %p16 = scmp.ge.s32.totalorder %s15, 4
      %s25 = sphi 0, %s27
      %s28 = sphi 0, %s25
      %s29 = sphi 0, %s28
      %s45 = sphi 0, %s29
      %s49 = sphi 0, %s49
      %s51 = sphi 0, %s49
      %s52 = sphi 0, %s51
      %s66 = sphi 0, %s52
      %s72 = sphi 0, %s74
      %s75 = sphi 0, %s72
      %s76 = sphi 0, %s75
      %s92 = sphi 0, %s76
    $region4: #{conv_feature_extraction_forward.8} parent=1 // loop_header_branch
      %18 = sbr.rel (%p16) target = $region8
    $region5: #{conv_feature_extraction_forward.8} parent=1 // loop_body
      %s20 = ssub.s32 %s15, 1
      %s21 = ssub.s32 %s15, 2
      %s22 = sadd.s32 %s15, 1
      %s23 = ssub.s32 %s15, %s22
      %p24 = scmp.eq.s32.totalorder %s23, 0
      %s26 = sadd.s32 %s25, 1
      %s27 = scalar_select %p24, %s25, %s26
      %p30 = pneg %p24
      %p31 = scmp.eq.s32.totalorder %s15, 1
      %p32 = por %p30, %p31
      %p33 = scmp.ne.s32.totalorder %s25, %s28
      %p34 = scmp.eq.s32.totalorder %s15, 0
      %p35 = por %p33, %p34
      %p36 = scmp.ne.s32.totalorder %s25, %s28
      %p37 = scmp.eq.s32.totalorder %s20, 1
      %p38 = por %p36, %p37
      %p39 = scmp.ne.s32.totalorder %s28, %s29
      %p40 = scmp.eq.s32.totalorder %s20, 0
      %p41 = por %p39, %p40
      %p42 = scmp.ne.s32.totalorder %s28, %s29
      %p43 = scmp.eq.s32.totalorder %s21, 1
      %p44 = por %p42, %p43
      %p46 = scmp.ne.s32.totalorder %s29, %s45
      %p47 = scmp.eq.s32.totalorder %s21, 0
      %p48 = por %p46, %p47
      %s50 = sadd.s32 %s49, 1
      %p53 = scmp.eq.s32.totalorder %s15, 1
      %p54 = scmp.ne.s32.totalorder %s49, %s51
      %p55 = scmp.eq.s32.totalorder %s15, 0
      %p56 = por %p54, %p55
      %p57 = scmp.ne.s32.totalorder %s49, %s51
      %p58 = scmp.eq.s32.totalorder %s20, 1
      %p59 = por %p57, %p58
      %p60 = scmp.ne.s32.totalorder %s51, %s52
      %p61 = scmp.eq.s32.totalorder %s20, 0
      %p62 = por %p60, %p61
      %p63 = scmp.ne.s32.totalorder %s51, %s52
      %p64 = scmp.eq.s32.totalorder %s21, 1
      %p65 = por %p63, %p64
      %p67 = scmp.ne.s32.totalorder %s52, %s66
      %p68 = scmp.eq.s32.totalorder %s21, 0
      %p69 = por %p67, %p68
      %s70 = ssub.s32 %s15, %s22
      %p71 = scmp.eq.s32.totalorder %s70, 0
      %s73 = sadd.s32 %s72, 1
      %s74 = scalar_select %p71, %s72, %s73
      %p77 = pneg %p71
      %p78 = scmp.eq.s32.totalorder %s15, 1
      %p79 = por %p77, %p78
      %p80 = scmp.ne.s32.totalorder %s72, %s75
      %p81 = scmp.eq.s32.totalorder %s15, 0
      %p82 = por %p80, %p81
      %p83 = scmp.ne.s32.totalorder %s72, %s75
      %p84 = scmp.eq.s32.totalorder %s20, 1
      %p85 = por %p83, %p84
      %p86 = scmp.ne.s32.totalorder %s75, %s76
      %p87 = scmp.eq.s32.totalorder %s20, 0
      %p88 = por %p86, %p87
      %p89 = scmp.ne.s32.totalorder %s75, %s76
      %p90 = scmp.eq.s32.totalorder %s21, 1
      %p91 = por %p89, %p90
      %p93 = scmp.ne.s32.totalorder %s76, %s92
      %p94 = scmp.eq.s32.totalorder %s21, 0
      %p95 = por %p93, %p94
      %p96 = scmp.le.s32.totalorder 1, %s15
      %p97 = scmp.lt.s32.totalorder %s15, 3
      %p98 = pnand %p96, %p97
      %p99 = pneg %p98
      // Predicated region
      $region9: #{conv_feature_extraction_forward.8} parent=5 // pred_check
        _
      $region10: #{conv_feature_extraction_forward.8} parent=5 // pred_check_branch
        %101 = sbr.rel (%p98) target = $region12
      $region11: #{conv_feature_extraction_forward.8} parent=5 // pred_region
        %s102 = ssub.s32 %s15, 1
        // Predicated region
        $region13: #{conv_feature_extraction_forward.8} parent=11 // pred_check
          %p103 = pneg %p62
        $region14: #{conv_feature_extraction_forward.8} parent=11 // pred_check_branch
          %105 = sbr.rel (%p103) target = $region16
        $region15: #{conv_feature_extraction_forward.8} parent=11 // pred_region
          %s107 = ssub.s32 1536, 1536
          %108 = vsyncadd [#allocation6], %s107
          %s109 = sshll.u32 [#allocation5], 4
          %s110 = int_to_ptr.vmem [resolvable:$true] %s109
          %115 = dma.hbm_to_vmem [thread:$0]  %s1, 1536, %s110, [#allocation6], 128, 128, 8
        $region16: #{conv_feature_extraction_forward.8} parent=11 // pred_fallthru
          _
      $region12: #{conv_feature_extraction_forward.8} parent=5 // pred_fallthru
        _
      %p116 = scmp.lt.s32.totalorder %s15, 2
      // Predicated region
      $region17: #{conv_feature_extraction_forward.8} parent=5 // pred_check
        %p117 = pneg %p116
      $region18: #{conv_feature_extraction_forward.8} parent=5 // pred_check_branch
        %119 = sbr.rel (%p117) target = $region20
      $region19: #{conv_feature_extraction_forward.8} parent=5 // pred_region
        // Predicated region
        $region21: #{conv_feature_extraction_forward.8} parent=19 // pred_check
          %p120 = pneg %p35
        $region22: #{conv_feature_extraction_forward.8} parent=19 // pred_check_branch
          %122 = sbr.rel (%p120) target = $region24
        $region23: #{conv_feature_extraction_forward.8} parent=19 // pred_region
          %s123 = sand.u32 %s25, 1
          %s124 = scalar_lea.sflag [#allocation3], %s123
          %s125 = sand.u32 %s25, 1
          %s126 = smul.addr %s125, 16
          %s127 = scalar_lea.vmem [#allocation2], %s126
          %s128 = smul.u32 2, %s15
          %s130 = ssub.s32 256, 256
          %131 = vsyncadd %s124, %s130
          %s132 = smul.addr %s128, 128
          %s133 = scalar_lea.hbm %s0, %s132
          %s134 = sshll.u32 %s127, 4
          %s135 = int_to_ptr.vmem [resolvable:$true] %s134
          %140 = dma.hbm_to_vmem [thread:$0]  %s133, 256, %s135, %s124, 128, 128, 8
        $region24: #{conv_feature_extraction_forward.8} parent=19 // pred_fallthru
          _
      $region20: #{conv_feature_extraction_forward.8} parent=5 // pred_fallthru
        _
      %p141 = scmp.le.s32.totalorder 1, %s15
      %p142 = scmp.lt.s32.totalorder %s15, 3
      %p143 = pnand %p141, %p142
      %p144 = pneg %p143
      // Predicated region
      $region25: #{conv_feature_extraction_forward.8} parent=5 // pred_check
        _
      $region26: #{conv_feature_extraction_forward.8} parent=5 // pred_check_branch
        %146 = sbr.rel (%p143) target = $region28
      $region27: #{conv_feature_extraction_forward.8} parent=5 // pred_region
        %s147 = ssub.s32 %s15, 1
        %s148 = sand.u32 %s28, 1
        %s149 = scalar_lea.sflag [#allocation3], %s148
        %s150 = sand.u32 %s28, 1
        %s151 = smul.addr %s150, 16
        %s152 = scalar_lea.vmem [#allocation2], %s151
        // Predicated region
        $region29: #{conv_feature_extraction_forward.8} parent=27 // pred_check
          %p153 = pneg %p41
        $region30: #{conv_feature_extraction_forward.8} parent=27 // pred_check_branch
          %155 = sbr.rel (%p153) target = $region32
        $region31: #{conv_feature_extraction_forward.8} parent=27 // pred_region
          %156 = dma.done %s149, 256
        $region32: #{conv_feature_extraction_forward.8} parent=27 // pred_fallthru
          _
        // Predicated region
        $region33: #{conv_feature_extraction_forward.8} parent=27 // pred_check
          %p157 = pneg %p62
        $region34: #{conv_feature_extraction_forward.8} parent=27 // pred_check_branch
          %159 = sbr.rel (%p157) target = $region36
        $region35: #{conv_feature_extraction_forward.8} parent=27 // pred_region
          %160 = dma.done [#allocation6], 1536
        $region36: #{conv_feature_extraction_forward.8} parent=27 // pred_fallthru
          _
        %s161 = sand.u32 %s28, 1
        %s162 = scalar_lea.sflag [#allocation3], %s161
        %s163 = sand.u32 %s28, 1
        %s164 = smul.addr %s163, 16
        %s165 = scalar_lea.vmem [#allocation2], %s164
        %p166 = pneg %p41
        %p167 = pneg %p38
        %p168 = pneg %p62
        %p169 = pneg %p59
        %p170 = pneg %p88
        %p171 = pneg %p85
        %s172 = sand.u32 %s75, 1
        %s173 = scalar_lea.sflag [#allocation4], %s172
        %s174 = sand.u32 %s75, 1
        %s175 = smul.addr %s174, 16
        %s176 = scalar_lea.vmem [#allocation7], %s175
        %s177 = smul.u32 2, %s20
        %s178 = smul.u32 2, %s20
        %v179 = vld [vmem:[%s152] sm:$0xff]
        %v180 = vld [vmem:[%s152 + $0x8] sm:$0xff]
        %v181 = vld [vmem:[#allocation5] sm:$0xff]
        %v182 = vld [vmem:[#allocation5 + $0x8] sm:$0xff]
        %v183 = vld [vmem:[#allocation5 + $0x10] sm:$0xff]
        %v184 = vld [vmem:[#allocation5 + $0x18] sm:$0xff]
        %v185 = vld [vmem:[#allocation5 + $0x20] sm:$0xff]
        %v186 = vld [vmem:[#allocation5 + $0x28] sm:$0xff]
        %v187 = vld [vmem:[#allocation5 + $0x30] sm:$0xff]
        %v188 = vld [vmem:[#allocation5 + $0x38] sm:$0xff]
        %v189 = vld [vmem:[#allocation5 + $0x40] sm:$0xff]
        %v190 = vld [vmem:[#allocation5 + $0x48] sm:$0xff]
        %v191 = vld [vmem:[#allocation5 + $0x50] sm:$0xff]
        %v192 = vld [vmem:[#allocation5 + $0x58] sm:$0xff]
        %vm193 = vcmask 785408
        %v195 = vsel %vm193, %v179, 0
        %v198 = vsel %vm193, %v180, 0
        %200 = vmatprep.subr.mxu0 0.0
        %201 = vmatpush1.msra.mxu0 %v181
        %202 = vmatprep.subr.mxu0 0.0
        %203 = vmatpush1.msra.mxu0 %v182
        %204 = vmatprep.subr.mxu0 0.0
        %205 = vmatpush1.msra.mxu0 %v183
        %206 = vmatprep.subr.mxu0 0.0
        %207 = vmatpush1.msra.mxu0 %v184
        %208 = vmatprep.subr.mxu0 0.0
        %209 = vmatpush1.msra.mxu0 %v185
        %210 = vmatprep.subr.mxu0 0.0
        %211 = vmatpush1.msra.mxu0 %v186
        %212 = vmatprep.subr.mxu0 0.0
        %213 = vmatpush1.msra.mxu0 %v187
        %214 = vmatprep.subr.mxu0 0.0
        %215 = vmatpush1.msra.mxu0 %v188
        %216 = vmatprep.subr.mxu0 0.0
        %217 = vmatpush1.msra.mxu0 %v189
        %218 = vmatprep.subr.mxu0 0.0
        %219 = vmatpush1.msra.mxu0 %v190
        %220 = vmatprep.subr.mxu0 0.0
        %221 = vmatpush1.msra.mxu0 %v191
        %222 = vmatprep.subr.mxu0 0.0
        %223 = vmatpush1.msra.mxu0 %v192
        %224 = vmatprep.subr.mxu0 0.0
        %225 = vmatpush1.msra.mxu0 0.0
        %226 = vmatprep.subr.mxu0 0.0
        %227 = vmatpush1.msra.mxu0 0.0
        %228 = vmatprep.subr.mxu0 0.0
        %229 = vmatpush1.msra.mxu0 0.0
        %230 = vmatprep.subr.mxu0 0.0
        %231 = vmatpush1.msra.mxu0 0.0
        %232 = vmatprep.subr.mxu0 0.0
        %233 = vmatpush1.msra.mxu0 0.0
        %234 = vmatprep.subr.mxu0 0.0
        %235 = vmatpush1.msra.mxu0 0.0
        %236 = vmatprep.subr.mxu0 0.0
        %237 = vmatpush1.msra.mxu0 0.0
        %238 = vmatprep.subr.mxu0 0.0
        %239 = vmatpush1.msra.mxu0 0.0
        %240 = vmatprep.subr.mxu0 0.0
        %241 = vmatpush1.msra.mxu0 0.0
        %242 = vmatprep.subr.mxu0 0.0
        %243 = vmatpush1.msra.mxu0 0.0
        %244 = vmatprep.subr.mxu0 0.0
        %245 = vmatpush1.msra.mxu0 0.0
        %246 = vmatprep.subr.mxu0 0.0
        %247 = vmatpush1.msra.mxu0 0.0
        %248 = vmatprep.subr.mxu0 0.0
        %249 = vmatpush1.msra.mxu0 0.0
        %250 = vmatprep.subr.mxu0 0.0
        %251 = vmatpush1.msra.mxu0 0.0
        %252 = vmatprep.subr.mxu0 0.0
        %253 = vmatpush1.msra.mxu0 0.0
        %254 = vmatprep.subr.mxu0 0.0
        %255 = vmatpush1.msra.mxu0 0.0
        %256 = vmatprep.subr.mxu0 0.0
        %257 = vmatpush1.msra.mxu0 0.0
        %258 = vmatprep.subr.mxu0 0.0
        %259 = vmatpush1.msra.mxu0 0.0
        %260 = vmatprep.subr.mxu0 0.0
        %261 = vmatpush1.msra.mxu0 0.0
        %262 = vmatprep.subr.mxu0 0.0
        %263 = vmatpush1.msra.mxu0 0.0
        %264 = vmatprep.mubr.f32.mxu0 0.0
        %265 = vmatmul.mubr.f32.gmra.mrb[0].mxu0 %v195
        %v266 = vpop.f32.mrb[0].mxu0
        %v267 = vadd.f32 0.0, %v266
        %v268 = vpop.f32.mrb[0].mxu0
        %269 = vmatprep.mubr.f32.mxu0 0.0
        %270 = vmatmul.mubr.f32.gmra.mrb[0].mxu0 %v198
        %v271 = vpop.f32.mrb[0].mxu0
        %v272 = vadd.f32 0.0, %v271
        %v273 = vpop.f32.mrb[0].mxu0
        %274 = vdwg.mxu0
        %v275 = vmul.f32 %v267, 0.5
        %v276 = vmul.f32 %v272, 0.5
        %v277 = vmul.f32 %v267, 0.70710677
        %v278 = vmul.f32 %v272, 0.70710677
        %v279 = vand.u32 2147483647, %v277
        %v280 = vand.u32 2147483647, %v278
        %v281 = vmul.f32 %v279, 0.3275911
        %v282 = vmul.f32 %v280, 0.3275911
        %v283 = vadd.f32 %v281, 1.0
        %v284 = vadd.f32 %v282, 1.0
        %v285 = vrcp.pop %v283
        %v286 = vmul.f32 1.0, %v285
        %v287 = vrcp.pop %v284
        %v288 = vmul.f32 1.0, %v287
        %v289 = vmul.f32 %v286, 1.0614054
        %v290 = vmul.f32 %v288, 1.0614054
        %v291 = vadd.f32 %v289, -1.4531521
        %v292 = vadd.f32 %v290, -1.4531521
        %v293 = vmul.f32 %v286, %v291
        %v294 = vmul.f32 %v288, %v292
        %v295 = vadd.f32 %v293, 1.4214138
        %v296 = vadd.f32 %v294, 1.4214138
        %v297 = vmul.f32 %v286, %v295
        %v298 = vmul.f32 %v288, %v296
        %v299 = vadd.f32 %v297, -0.28449672
        %v300 = vadd.f32 %v298, -0.28449672
        %v301 = vmul.f32 %v286, %v299
        %v302 = vmul.f32 %v288, %v300
        %v303 = vadd.f32 %v301, 0.2548296
        %v304 = vadd.f32 %v302, 0.2548296
        %v305 = vmul.f32 %v286, %v303
        %v306 = vmul.f32 %v288, %v304
        %v307 = vsub.f32 0.0, %v279
        %v308 = vsub.f32 0.0, %v280
        %v309 = vmul.f32 %v307, %v279
        %v310 = vmul.f32 %v308, %v280
        %v311 = vmul.f32 %v309, 1.442695
        %v312 = vpow.pop %v311
        %v313 = vmul.f32 %v310, 1.442695
        %v314 = vpow.pop %v313
        %v315 = vmul.f32 %v305, %v312
        %v316 = vmul.f32 %v306, %v314
        %v317 = vsub.f32 1.0, %v315
        %v318 = vsub.f32 1.0, %v316
        %vm319 = vcmp.ge.f32.partialorder %v277, 0.0
        %vm320 = vcmp.ge.f32.partialorder %v278, 0.0
        %v321 = vsub.f32 0.0, %v317
        %v322 = vsub.f32 0.0, %v318
        %v323 = vsel %vm319, %v317, %v321
        %v324 = vsel %vm320, %v318, %v322
        %v325 = vadd.f32 %v323, 1.0
        %v326 = vadd.f32 %v324, 1.0
        %v327 = vmul.f32 %v275, %v325
        %v328 = vmul.f32 %v276, %v326
        %vm329 = vcmask 261120
        %330 = vst.msk [vmem:[%s176] sm:$0xff] %vm329, %v327
        %331 = vst.msk [vmem:[%s176 + $0x8] sm:$0xff] %vm329, %v328
        %s332 = sand.u32 %s75, 1
        %s333 = scalar_lea.sflag [#allocation4], %s332
        %s334 = sand.u32 %s75, 1
        %s335 = smul.addr %s334, 16
        %s336 = scalar_lea.vmem [#allocation7], %s335
        // Predicated region
        $region37: #{conv_feature_extraction_forward.8} parent=27 // pred_check
          %p337 = pneg %p85
        $region38: #{conv_feature_extraction_forward.8} parent=27 // pred_check_branch
          %339 = sbr.rel (%p337) target = $region40
        $region39: #{conv_feature_extraction_forward.8} parent=27 // pred_region
          %s340 = smul.u32 2, %s20
          %s342 = ssub.s32 256, 256
          %343 = vsyncadd %s333, %s342
          %s344 = smul.addr %s340, 128
          %s345 = scalar_lea.hbm %s2, %s344
          %s346 = sshll.u32 %s336, 4
          %s347 = int_to_ptr.vmem [resolvable:$true] %s346
          %352 = dma.vmem_to_hbm [thread:$0]  %s347, 256, %s345, %s333, 128, 128, 8
        $region40: #{conv_feature_extraction_forward.8} parent=27 // pred_fallthru
          _
      $region28: #{conv_feature_extraction_forward.8} parent=5 // pred_fallthru
        _
      %p353 = scmp.le.s32.totalorder 2, %s15
      // Predicated region
      $region41: #{conv_feature_extraction_forward.8} parent=5 // pred_check
        %p354 = pneg %p353
      $region42: #{conv_feature_extraction_forward.8} parent=5 // pred_check_branch
        %356 = sbr.rel (%p354) target = $region44
      $region43: #{conv_feature_extraction_forward.8} parent=5 // pred_region
        %s357 = ssub.s32 %s15, 2
        // Predicated region
        $region45: #{conv_feature_extraction_forward.8} parent=43 // pred_check
          %p358 = pneg %p91
        $region46: #{conv_feature_extraction_forward.8} parent=43 // pred_check_branch
          %360 = sbr.rel (%p358) target = $region48
        $region47: #{conv_feature_extraction_forward.8} parent=43 // pred_region
          %s361 = sand.u32 %s76, 1
          %s362 = scalar_lea.sflag [#allocation4], %s361
          %s363 = sand.u32 %s76, 1
          %s364 = smul.addr %s363, 16
          %s365 = scalar_lea.vmem [#allocation7], %s364
          %366 = dma.done %s362, 256
        $region48: #{conv_feature_extraction_forward.8} parent=43 // pred_fallthru
          _
      $region44: #{conv_feature_extraction_forward.8} parent=5 // pred_fallthru
        _
    $region6: #{conv_feature_extraction_forward.8} parent=1 // loop_footer
      %s19 = sadd.s32 1, %s15
    $region7: #{conv_feature_extraction_forward.8} parent=1 // loop_footer_branch
      %14 = sbr.rel target = $region3
    $region8: #{conv_feature_extraction_forward.8} parent=1 // loop_exit
      _
    %367 = vsyncpa [#allocation3], 1
    %s368 = scalar_lea.sflag [#allocation3], 1
    %369 = vsyncpa %s368, 1
    %370 = vsyncpa [#allocation6], 1
    %371 = vsyncpa [#allocation4], 1
    %s372 = scalar_lea.sflag [#allocation4], 1
    %373 = vsyncpa %s372, 1

// kernel: conv_feature_extraction_forward.9
$region0: #{conv_feature_extraction_forward.9}
  #allocation0 [shape = 'u32[]', space=smem, size = 0x4, offset = 0x4, fixed_abs, tag = 'smem constant byte address 0x4 - core index']
  #allocation1 [shape = 'u32[144,128]{1,0:T(1,128)}', space=vmem, size = 0x12000, scoped, tag = 'internal scratch']
  %s0 = inlined_call_operand.hbm [shape: f32[14,64], index: 0, kind: input, shape index: {}]
  %s1 = inlined_call_operand.hbm [shape: f32[64,32], index: 1, kind: input, shape index: {}]
  %s2 = inlined_call_operand.hbm [shape: f32[14,32], index: 2, kind: output, shape index: {}]
  %s3 = sld [smem:[#allocation0]]
  $region49: #{conv_feature_extraction_forward.9} parent=0
    _
  %s5 = ssub.s32 1, %s3
  %s6 = scalar_select 0, %s5, %s3
  $region1: #{conv_feature_extraction_forward.9} parent=0
    #allocation2 [shape = 'u8[8192]{0}', space=vmem, size = 0x2000, scoped, tag = 'input window, operand 0']
    #allocation3 [shape = 's32[2]{0}', space=sflag, size = 0x8, scoped, tag = 'scoped memory for conv_feature_extraction_forward.9']
    #allocation4 [shape = 's32[2]{0}', space=sflag, size = 0x8, scoped, tag = 'scoped memory for conv_feature_extraction_forward.9']
    #allocation5 [shape = 'u8[32768]{0}', space=vmem, size = 0x8000, scoped, tag = 'input window, operand 1, single buffered']
    #allocation6 [shape = 's32[1]{0}', space=sflag, size = 0x4, scoped, tag = 'scoped memory for conv_feature_extraction_forward.9']
    #allocation7 [shape = 'u8[8192]{0}', space=vmem, size = 0x2000, scoped, tag = 'output window, operand 0']
    %7 = vsyncpa [#allocation3], 0
    %s8 = scalar_lea.sflag [#allocation3], 1
    %9 = vsyncpa %s8, 0
    %10 = vsyncpa [#allocation6], 0
    %11 = vsyncpa [#allocation4], 0
    %s12 = scalar_lea.sflag [#allocation4], 1
    %13 = vsyncpa %s12, 0
    loop: start=0, step=1, limit=4
    $region2: #{conv_feature_extraction_forward.9} parent=1 // loop_pre_header
      _
    $region3: #{conv_feature_extraction_forward.9} parent=1 // loop_header
      %s15 = sphi 0, %s19
      %p16 = scmp.ge.s32.totalorder %s15, 4
      %s25 = sphi 0, %s27
      %s28 = sphi 0, %s25
      %s29 = sphi 0, %s28
      %s45 = sphi 0, %s29
      %s49 = sphi 0, %s49
      %s51 = sphi 0, %s49
      %s52 = sphi 0, %s51
      %s66 = sphi 0, %s52
      %s72 = sphi 0, %s74
      %s75 = sphi 0, %s72
      %s76 = sphi 0, %s75
      %s92 = sphi 0, %s76
    $region4: #{conv_feature_extraction_forward.9} parent=1 // loop_header_branch
      %18 = sbr.rel (%p16) target = $region8
    $region5: #{conv_feature_extraction_forward.9} parent=1 // loop_body
      %s20 = ssub.s32 %s15, 1
      %s21 = ssub.s32 %s15, 2
      %s22 = sadd.s32 %s15, 1
      %s23 = ssub.s32 %s15, %s22
      %p24 = scmp.eq.s32.totalorder %s23, 0
      %s26 = sadd.s32 %s25, 1
      %s27 = scalar_select %p24, %s25, %s26
      %p30 = pneg %p24
      %p31 = scmp.eq.s32.totalorder %s15, 1
      %p32 = por %p30, %p31
      %p33 = scmp.ne.s32.totalorder %s25, %s28
      %p34 = scmp.eq.s32.totalorder %s15, 0
      %p35 = por %p33, %p34
      %p36 = scmp.ne.s32.totalorder %s25, %s28
      %p37 = scmp.eq.s32.totalorder %s20, 1
      %p38 = por %p36, %p37
      %p39 = scmp.ne.s32.totalorder %s28, %s29
      %p40 = scmp.eq.s32.totalorder %s20, 0
      %p41 = por %p39, %p40
      %p42 = scmp.ne.s32.totalorder %s28, %s29
      %p43 = scmp.eq.s32.totalorder %s21, 1
      %p44 = por %p42, %p43
      %p46 = scmp.ne.s32.totalorder %s29, %s45
      %p47 = scmp.eq.s32.totalorder %s21, 0
      %p48 = por %p46, %p47
      %s50 = sadd.s32 %s49, 1
      %p53 = scmp.eq.s32.totalorder %s15, 1
      %p54 = scmp.ne.s32.totalorder %s49, %s51
      %p55 = scmp.eq.s32.totalorder %s15, 0
      %p56 = por %p54, %p55
      %p57 = scmp.ne.s32.totalorder %s49, %s51
      %p58 = scmp.eq.s32.totalorder %s20, 1
      %p59 = por %p57, %p58
      %p60 = scmp.ne.s32.totalorder %s51, %s52
      %p61 = scmp.eq.s32.totalorder %s20, 0
      %p62 = por %p60, %p61
      %p63 = scmp.ne.s32.totalorder %s51, %s52
      %p64 = scmp.eq.s32.totalorder %s21, 1
      %p65 = por %p63, %p64
      %p67 = scmp.ne.s32.totalorder %s52, %s66
      %p68 = scmp.eq.s32.totalorder %s21, 0
      %p69 = por %p67, %p68
      %s70 = ssub.s32 %s15, %s22
      %p71 = scmp.eq.s32.totalorder %s70, 0
      %s73 = sadd.s32 %s72, 1
      %s74 = scalar_select %p71, %s72, %s73
      %p77 = pneg %p71
      %p78 = scmp.eq.s32.totalorder %s15, 1
      %p79 = por %p77, %p78
      %p80 = scmp.ne.s32.totalorder %s72, %s75
      %p81 = scmp.eq.s32.totalorder %s15, 0
      %p82 = por %p80, %p81
      %p83 = scmp.ne.s32.totalorder %s72, %s75
      %p84 = scmp.eq.s32.totalorder %s20, 1
      %p85 = por %p83, %p84
      %p86 = scmp.ne.s32.totalorder %s75, %s76
      %p87 = scmp.eq.s32.totalorder %s20, 0
      %p88 = por %p86, %p87
      %p89 = scmp.ne.s32.totalorder %s75, %s76
      %p90 = scmp.eq.s32.totalorder %s21, 1
      %p91 = por %p89, %p90
      %p93 = scmp.ne.s32.totalorder %s76, %s92
      %p94 = scmp.eq.s32.totalorder %s21, 0
      %p95 = por %p93, %p94
      %p96 = scmp.le.s32.totalorder 1, %s15
      %p97 = scmp.lt.s32.totalorder %s15, 3
      %p98 = pnand %p96, %p97
      %p99 = pneg %p98
      // Predicated region
      $region9: #{conv_feature_extraction_forward.9} parent=5 // pred_check
        _
      $region10: #{conv_feature_extraction_forward.9} parent=5 // pred_check_branch
        %101 = sbr.rel (%p98) target = $region12
      $region11: #{conv_feature_extraction_forward.9} parent=5 // pred_region
        %s102 = ssub.s32 %s15, 1
        // Predicated region
        $region13: #{conv_feature_extraction_forward.9} parent=11 // pred_check
          %p103 = pneg %p62
        $region14: #{conv_feature_extraction_forward.9} parent=11 // pred_check_branch
          %105 = sbr.rel (%p103) target = $region16
        $region15: #{conv_feature_extraction_forward.9} parent=11 // pred_region
          %s107 = ssub.s32 1024, 1024
          %108 = vsyncadd [#allocation6], %s107
          %s109 = sshll.u32 [#allocation5], 4
          %s110 = int_to_ptr.vmem [resolvable:$true] %s109
          %115 = dma.hbm_to_vmem [thread:$0]  %s1, 1024, %s110, [#allocation6], 128, 128, 8
        $region16: #{conv_feature_extraction_forward.9} parent=11 // pred_fallthru
          _
      $region12: #{conv_feature_extraction_forward.9} parent=5 // pred_fallthru
        _
      %p116 = scmp.lt.s32.totalorder %s15, 2
      // Predicated region
      $region17: #{conv_feature_extraction_forward.9} parent=5 // pred_check
        %p117 = pneg %p116
      $region18: #{conv_feature_extraction_forward.9} parent=5 // pred_check_branch
        %119 = sbr.rel (%p117) target = $region20
      $region19: #{conv_feature_extraction_forward.9} parent=5 // pred_region
        // Predicated region
        $region21: #{conv_feature_extraction_forward.9} parent=19 // pred_check
          %p120 = pneg %p35
        $region22: #{conv_feature_extraction_forward.9} parent=19 // pred_check_branch
          %122 = sbr.rel (%p120) target = $region24
        $region23: #{conv_feature_extraction_forward.9} parent=19 // pred_region
          %s123 = sand.u32 %s25, 1
          %s124 = scalar_lea.sflag [#allocation3], %s123
          %s125 = sand.u32 %s25, 1
          %s126 = smul.addr %s125, 8
          %s127 = scalar_lea.vmem [#allocation2], %s126
          %s129 = ssub.s32 128, 128
          %130 = vsyncadd %s124, %s129
          %s131 = smul.addr %s15, 128
          %s132 = scalar_lea.hbm %s0, %s131
          %s134 = sshll.u32 %s127, 4
          %s135 = int_to_ptr.vmem [resolvable:$true] %s134
          %137 = dma.hbm_to_vmem [thread:$0]  %s132, 128, %s135, %s124
        $region24: #{conv_feature_extraction_forward.9} parent=19 // pred_fallthru
          _
      $region20: #{conv_feature_extraction_forward.9} parent=5 // pred_fallthru
        _
      %p138 = scmp.le.s32.totalorder 1, %s15
      %p139 = scmp.lt.s32.totalorder %s15, 3
      %p140 = pnand %p138, %p139
      %p141 = pneg %p140
      // Predicated region
      $region25: #{conv_feature_extraction_forward.9} parent=5 // pred_check
        _
      $region26: #{conv_feature_extraction_forward.9} parent=5 // pred_check_branch
        %143 = sbr.rel (%p140) target = $region28
      $region27: #{conv_feature_extraction_forward.9} parent=5 // pred_region
        %s144 = ssub.s32 %s15, 1
        %s145 = sand.u32 %s28, 1
        %s146 = scalar_lea.sflag [#allocation3], %s145
        %s147 = sand.u32 %s28, 1
        %s148 = smul.addr %s147, 8
        %s149 = scalar_lea.vmem [#allocation2], %s148
        // Predicated region
        $region29: #{conv_feature_extraction_forward.9} parent=27 // pred_check
          %p150 = pneg %p41
        $region30: #{conv_feature_extraction_forward.9} parent=27 // pred_check_branch
          %152 = sbr.rel (%p150) target = $region32
        $region31: #{conv_feature_extraction_forward.9} parent=27 // pred_region
          %153 = dma.done %s146, 128
        $region32: #{conv_feature_extraction_forward.9} parent=27 // pred_fallthru
          _
        // Predicated region
        $region33: #{conv_feature_extraction_forward.9} parent=27 // pred_check
          %p154 = pneg %p62
        $region34: #{conv_feature_extraction_forward.9} parent=27 // pred_check_branch
          %156 = sbr.rel (%p154) target = $region36
        $region35: #{conv_feature_extraction_forward.9} parent=27 // pred_region
          %157 = dma.done [#allocation6], 1024
        $region36: #{conv_feature_extraction_forward.9} parent=27 // pred_fallthru
          _
        %s158 = sand.u32 %s28, 1
        %s159 = scalar_lea.sflag [#allocation3], %s158
        %s160 = sand.u32 %s28, 1
        %s161 = smul.addr %s160, 8
        %s162 = scalar_lea.vmem [#allocation2], %s161
        %p163 = pneg %p41
        %p164 = pneg %p38
        %p165 = pneg %p62
        %p166 = pneg %p59
        %p167 = pneg %p88
        %p168 = pneg %p85
        %s169 = sand.u32 %s75, 1
        %s170 = scalar_lea.sflag [#allocation4], %s169
        %s171 = sand.u32 %s75, 1
        %s172 = smul.addr %s171, 8
        %s173 = scalar_lea.vmem [#allocation7], %s172
        %v174 = vld [vmem:[%s149] sm:$0xff]
        %v175 = vld [vmem:[#allocation5] sm:$0xff]
        %v176 = vld [vmem:[#allocation5 + $0x8] sm:$0xff]
        %v177 = vld [vmem:[#allocation5 + $0x10] sm:$0xff]
        %v178 = vld [vmem:[#allocation5 + $0x18] sm:$0xff]
        %v179 = vld [vmem:[#allocation5 + $0x20] sm:$0xff]
        %v180 = vld [vmem:[#allocation5 + $0x28] sm:$0xff]
        %v181 = vld [vmem:[#allocation5 + $0x30] sm:$0xff]
        %v182 = vld [vmem:[#allocation5 + $0x38] sm:$0xff]
        %vm183 = vcmask 523264
        %v185 = vsel %vm183, %v174, 0
        %187 = vmatprep.subr.mxu0 0.0
        %188 = vmatpush1.msra.mxu0 %v175
        %189 = vmatprep.subr.mxu0 0.0
        %190 = vmatpush1.msra.mxu0 %v176
        %191 = vmatprep.subr.mxu0 0.0
        %192 = vmatpush1.msra.mxu0 %v177
        %193 = vmatprep.subr.mxu0 0.0
        %194 = vmatpush1.msra.mxu0 %v178
        %195 = vmatprep.subr.mxu0 0.0
        %196 = vmatpush1.msra.mxu0 %v179
        %197 = vmatprep.subr.mxu0 0.0
        %198 = vmatpush1.msra.mxu0 %v180
        %199 = vmatprep.subr.mxu0 0.0
        %200 = vmatpush1.msra.mxu0 %v181
        %201 = vmatprep.subr.mxu0 0.0
        %202 = vmatpush1.msra.mxu0 %v182
        %203 = vmatprep.subr.mxu0 0.0
        %204 = vmatpush1.msra.mxu0 0.0
        %205 = vmatprep.subr.mxu0 0.0
        %206 = vmatpush1.msra.mxu0 0.0
        %207 = vmatprep.subr.mxu0 0.0
        %208 = vmatpush1.msra.mxu0 0.0
        %209 = vmatprep.subr.mxu0 0.0
        %210 = vmatpush1.msra.mxu0 0.0
        %211 = vmatprep.subr.mxu0 0.0
        %212 = vmatpush1.msra.mxu0 0.0
        %213 = vmatprep.subr.mxu0 0.0
        %214 = vmatpush1.msra.mxu0 0.0
        %215 = vmatprep.subr.mxu0 0.0
        %216 = vmatpush1.msra.mxu0 0.0
        %217 = vmatprep.subr.mxu0 0.0
        %218 = vmatpush1.msra.mxu0 0.0
        %219 = vmatprep.subr.mxu0 0.0
        %220 = vmatpush1.msra.mxu0 0.0
        %221 = vmatprep.subr.mxu0 0.0
        %222 = vmatpush1.msra.mxu0 0.0
        %223 = vmatprep.subr.mxu0 0.0
        %224 = vmatpush1.msra.mxu0 0.0
        %225 = vmatprep.subr.mxu0 0.0
        %226 = vmatpush1.msra.mxu0 0.0
        %227 = vmatprep.subr.mxu0 0.0
        %228 = vmatpush1.msra.mxu0 0.0
        %229 = vmatprep.subr.mxu0 0.0
        %230 = vmatpush1.msra.mxu0 0.0
        %231 = vmatprep.subr.mxu0 0.0
        %232 = vmatpush1.msra.mxu0 0.0
        %233 = vmatprep.subr.mxu0 0.0
        %234 = vmatpush1.msra.mxu0 0.0
        %235 = vmatprep.subr.mxu0 0.0
        %236 = vmatpush1.msra.mxu0 0.0
        %237 = vmatprep.subr.mxu0 0.0
        %238 = vmatpush1.msra.mxu0 0.0
        %239 = vmatprep.subr.mxu0 0.0
        %240 = vmatpush1.msra.mxu0 0.0
        %241 = vmatprep.subr.mxu0 0.0
        %242 = vmatpush1.msra.mxu0 0.0
        %243 = vmatprep.subr.mxu0 0.0
        %244 = vmatpush1.msra.mxu0 0.0
        %245 = vmatprep.subr.mxu0 0.0
        %246 = vmatpush1.msra.mxu0 0.0
        %247 = vmatprep.subr.mxu0 0.0
        %248 = vmatpush1.msra.mxu0 0.0
        %249 = vmatprep.subr.mxu0 0.0
        %250 = vmatpush1.msra.mxu0 0.0
        %251 = vmatprep.mubr.f32.mxu0 0.0
        %252 = vmatmul.mubr.f32.gmra.mrb[0].mxu0 %v185
        %v253 = vpop.f32.mrb[0].mxu0
        %v254 = vadd.f32 0.0, %v253
        %v255 = vpop.f32.mrb[0].mxu0
        %256 = vdwg.mxu0
        %v257 = vmul.f32 %v254, 0.5
        %v258 = vmul.f32 %v254, 0.70710677
        %v259 = vand.u32 2147483647, %v258
        %v260 = vmul.f32 %v259, 0.3275911
        %v261 = vadd.f32 %v260, 1.0
        %v262 = vrcp.pop %v261
        %v263 = vmul.f32 1.0, %v262
        %v264 = vmul.f32 %v263, 1.0614054
        %v265 = vadd.f32 %v264, -1.4531521
        %v266 = vmul.f32 %v263, %v265
        %v267 = vadd.f32 %v266, 1.4214138
        %v268 = vmul.f32 %v263, %v267
        %v269 = vadd.f32 %v268, -0.28449672
        %v270 = vmul.f32 %v263, %v269
        %v271 = vadd.f32 %v270, 0.2548296
        %v272 = vmul.f32 %v263, %v271
        %v273 = vsub.f32 0.0, %v259
        %v274 = vmul.f32 %v273, %v259
        %v275 = vmul.f32 %v274, 1.442695
        %v276 = vpow.pop %v275
        %v277 = vmul.f32 %v272, %v276
        %v278 = vsub.f32 1.0, %v277
        %vm279 = vcmp.ge.f32.partialorder %v258, 0.0
        %v280 = vsub.f32 0.0, %v278
        %v281 = vsel %vm279, %v278, %v280
        %v282 = vadd.f32 %v281, 1.0
        %v283 = vmul.f32 %v257, %v282
        %vm284 = vcmask 261120
        %285 = vst.msk [vmem:[%s173] sm:$0xff] %vm284, %v283
        %s286 = sand.u32 %s75, 1
        %s287 = scalar_lea.sflag [#allocation4], %s286
        %s288 = sand.u32 %s75, 1
        %s289 = smul.addr %s288, 8
        %s290 = scalar_lea.vmem [#allocation7], %s289
        // Predicated region
        $region37: #{conv_feature_extraction_forward.9} parent=27 // pred_check
          %p291 = pneg %p85
        $region38: #{conv_feature_extraction_forward.9} parent=27 // pred_check_branch
          %293 = sbr.rel (%p291) target = $region40
        $region39: #{conv_feature_extraction_forward.9} parent=27 // pred_region
          %s295 = ssub.s32 128, 128
          %296 = vsyncadd %s287, %s295
          %s297 = smul.addr %s20, 128
          %s298 = scalar_lea.hbm %s2, %s297
          %s300 = sshll.u32 %s290, 4
          %s301 = int_to_ptr.vmem [resolvable:$true] %s300
          %303 = dma.vmem_to_hbm [thread:$0]  %s301, 128, %s298, %s287
        $region40: #{conv_feature_extraction_forward.9} parent=27 // pred_fallthru
          _
      $region28: #{conv_feature_extraction_forward.9} parent=5 // pred_fallthru
        _
      %p304 = scmp.le.s32.totalorder 2, %s15
      // Predicated region
      $region41: #{conv_feature_extraction_forward.9} parent=5 // pred_check
        %p305 = pneg %p304
      $region42: #{conv_feature_extraction_forward.9} parent=5 // pred_check_branch
        %307 = sbr.rel (%p305) target = $region44
      $region43: #{conv_feature_extraction_forward.9} parent=5 // pred_region
        %s308 = ssub.s32 %s15, 2
        // Predicated region
        $region45: #{conv_feature_extraction_forward.9} parent=43 // pred_check
          %p309 = pneg %p91
        $region46: #{conv_feature_extraction_forward.9} parent=43 // pred_check_branch
          %311 = sbr.rel (%p309) target = $region48
        $region47: #{conv_feature_extraction_forward.9} parent=43 // pred_region
          %s312 = sand.u32 %s76, 1
          %s313 = scalar_lea.sflag [#allocation4], %s312
          %s314 = sand.u32 %s76, 1
          %s315 = smul.addr %s314, 8
          %s316 = scalar_lea.vmem [#allocation7], %s315
          %317 = dma.done %s313, 128
        $region48: #{conv_feature_extraction_forward.9} parent=43 // pred_fallthru
          _
      $region44: #{conv_feature_extraction_forward.9} parent=5 // pred_fallthru
        _
    $region6: #{conv_feature_extraction_forward.9} parent=1 // loop_footer
      %s19 = sadd.s32 1, %s15
    $region7: #{conv_feature_extraction_forward.9} parent=1 // loop_footer_branch
      %14 = sbr.rel target = $region3
    $region8: #{conv_feature_extraction_forward.9} parent=1 // loop_exit
      _
    %318 = vsyncpa [#allocation3], 1
    %s319 = scalar_lea.sflag [#allocation3], 1
    %320 = vsyncpa %s319, 1
    %321 = vsyncpa [#allocation6], 1
    %322 = vsyncpa [#allocation4], 1
    %s323 = scalar_lea.sflag [#allocation4], 1
    %324 = vsyncpa %s323, 1

</llo_original>
